<compile_context>
chip_gen: v7x
topology: tpu7x:2x2x1
jax: 0.10.0
libtpu: 0.0.40
codegen_flags: <defaults>
</compile_context>

<pallas_src>
import functools

import jax
import jax.numpy as jnp
from jax.experimental import pallas as pl
from jax.experimental.pallas import tpu as pltpu

EPS = 1e-5  # nn.BatchNorm2d default


def residual_block_kernel(x_ref, masks_ref, w1_ref, w2_ref,
                          g1_ref, b1_ref, g2_ref, b2_ref, out_ref,
                          *, n, c, h, w):
    nhw = n * h * w
    x = x_ref[...].astype(jnp.float32)          # (C, N*H*W) lane-dense slab
    masks = masks_ref[...]                      # (9, N*H*W) f32 boundary masks

    def conv3x3(slab, w_ref):
        """3x3 conv, pad=1, stride=1, no bias.

        slab:  (Cin, N*H*W) f32
        w_ref: (3, Cout, 3*Cin) bf16 row-grouped weights
        Row-group accumulation: for each kernel row dh, build the 3 shifted +
        masked taps (rolls are XLU, masks are VPU -- both off the MXU slot),
        stack to (3*Cin, N*H*W) and do one bf16 MXU matmul into an f32 acc.
        """
        w_all = w_ref[...]                      # (3, Cout, 3*Cin) bf16
        acc = jnp.zeros((c, nhw), dtype=jnp.float32)
        for dh in range(3):
            rows = []
            for dw in range(3):
                off = (dh - 1) * w + (dw - 1)   # flat lane offset of this tap
                if off == 0:
                    shifted = slab
                else:
                    # shifted[:, p] == slab[:, (p + off) % nhw]
                    shifted = pltpu.roll(slab, (-off) % nhw, axis=1)
                t = dh * 3 + dw
                rows.append(shifted * masks[t:t + 1, :])
            grp = jnp.concatenate(rows, axis=0).astype(jnp.bfloat16)
            acc = acc + jnp.dot(w_all[dh], grp,
                                preferred_element_type=jnp.float32)
        return acc

    def batchnorm(y, g_ref, b_ref):
        """Training-mode BatchNorm2d: per-channel stats over the lane axis."""
        mean = jnp.mean(y, axis=1, keepdims=True)              # (C, 1)
        d = y - mean
        var = jnp.mean(d * d, axis=1, keepdims=True)           # biased, (C, 1)
        return d * jax.lax.rsqrt(var + EPS) * g_ref[...] + b_ref[...]

    # conv1 -> bn1 -> relu
    y1 = jnp.maximum(batchnorm(conv3x3(x, w1_ref), g1_ref, b1_ref), 0.0)
    # conv2 -> bn2
    y2 = batchnorm(conv3x3(y1, w2_ref), g2_ref, b2_ref)
    # identity residual (downsample=None) + relu, unmasked lane-dense store
    out_ref[...] = jnp.maximum(y2 + x, 0.0).astype(out_ref.dtype)


def _row_group_weights(w_hwio):
    """(3,3,Cin,Cout) HWIO -> (3, Cout, 3*Cin), column order (dw, ci) so that
    out[co, p] = sum_dh  W[dh] @ [tap(dh,0); tap(dh,1); tap(dh,2)]."""
    kh, kw, ci, co = w_hwio.shape
    return jnp.transpose(w_hwio, (0, 3, 1, 2)).reshape(kh, co, kw * ci)


def _tap_masks(h, w, n):
    """(9, N*H*W) f32 masks: implicit zero padding per tap, tiled over batch
    so rolls over the flat N*H*W lane axis never leak across images."""
    p = jnp.arange(h * w)
    hh = p // w
    ww = p % w
    all_true = jnp.ones((h * w,), dtype=bool)
    h_ok = jnp.stack([hh >= 1, all_true, hh <= h - 2])   # dh = 0, 1, 2
    w_ok = jnp.stack([ww >= 1, all_true, ww <= w - 2])   # dw = 0, 1, 2
    m = (h_ok[:, None, :] & w_ok[None, :, :]).reshape(9, h * w)
    return jnp.tile(m.astype(jnp.float32), (1, n))       # (9, N*H*W)


@jax.jit
def residual_block(x_nchw, w1_hwio, w2_hwio, g1, b1, g2, b2):
    N, C, H, W = x_nchw.shape
    assert w1_hwio.shape == (3, 3, C, C) and w2_hwio.shape == (3, 3, C, C), (
        "identity residual (downsample=None) requires in_channels == out_channels")

    # (C, N*H*W): channels on sublanes, batch*spatial on lanes (one transpose
    # in the wrapper; N*H*W = 512 here, a multiple of 128 -> lane-dense).
    x_slab = x_nchw.transpose(1, 0, 2, 3).reshape(C, N * H * W)
    w1 = _row_group_weights(w1_hwio).astype(jnp.bfloat16)    # (3, C, 3*C)
    w2 = _row_group_weights(w2_hwio).astype(jnp.bfloat16)
    masks = _tap_masks(H, W, N)                              # (9, N*H*W)

    vmem = pl.BlockSpec(memory_space=pltpu.MemorySpace.VMEM)
    out_slab = pl.pallas_call(
        functools.partial(residual_block_kernel, n=N, c=C, h=H, w=W),
        out_shape=jax.ShapeDtypeStruct((C, N * H * W), x_nchw.dtype),
        in_specs=[vmem] * 8,
        out_specs=vmem,
        compiler_params=pltpu.CompilerParams(
            vmem_limit_bytes=48 * 1024 * 1024),
    )(x_slab, masks, w1, w2,
      g1.reshape(C, 1).astype(jnp.float32), b1.reshape(C, 1).astype(jnp.float32),
      g2.reshape(C, 1).astype(jnp.float32), b2.reshape(C, 1).astype(jnp.float32))
    return out_slab.reshape(C, N, H, W).transpose(1, 0, 2, 3)


def reference_forward(x_nchw, w1_hwio, w2_hwio, g1, b1, g2, b2):
    """Pure-JAX reference matching the PyTorch forward (training-mode BN)."""
    def conv(x, w):
        return jax.lax.conv_general_dilated(
            x, w, window_strides=(1, 1), padding=((1, 1), (1, 1)),
            dimension_numbers=('NCHW', 'HWIO', 'NCHW'))

    def bn(y, g, b):
        mean = jnp.mean(y, axis=(0, 2, 3), keepdims=True)
        var = jnp.mean((y - mean) ** 2, axis=(0, 2, 3), keepdims=True)
        yhat = (y - mean) / jnp.sqrt(var + EPS)
        return yhat * g.reshape(1, -1, 1, 1) + b.reshape(1, -1, 1, 1)

    out = jnp.maximum(bn(conv(x_nchw, w1_hwio), g1, b1), 0.0)
    out = bn(conv(out, w2_hwio), g2, b2)
    return jnp.maximum(out + x_nchw, 0.0)


if __name__ == "__main__":
    N, C, H, W = 2, 4, 16, 16   # in_channels == out_channels == 4

    key = jax.random.PRNGKey(0)
    kx, kw1, kw2, kg1, kb1, kg2, kb2 = jax.random.split(key, 7)

    x = jax.random.normal(kx, (N, C, H, W), dtype=jnp.float32)
    # conv weights: nn.Conv2d(C, C, 3) without bias, stored as HWIO.
    w1 = 0.1 * jax.random.normal(kw1, (3, 3, C, C), dtype=jnp.float32)
    w2 = 0.1 * jax.random.normal(kw2, (3, 3, C, C), dtype=jnp.float32)
    # BatchNorm affine params (non-trivial, deterministic)
    g1 = 1.0 + 0.1 * jax.random.normal(kg1, (C,), dtype=jnp.float32)
    b1 = 0.1 * jax.random.normal(kb1, (C,), dtype=jnp.float32)
    g2 = 1.0 + 0.1 * jax.random.normal(kg2, (C,), dtype=jnp.float32)
    b2 = 0.1 * jax.random.normal(kb2, (C,), dtype=jnp.float32)

    out = residual_block(x, w1, w2, g1, b1, g2, b2)
    jax.block_until_ready(out)

    ref = reference_forward(x, w1, w2, g1, b1, g2, b2)
    assert out.shape == (N, C, H, W)
    max_err = float(jnp.max(jnp.abs(out - ref)))
    # Tolerance loosened vs. the all-f32 version because conv operands are
    # bf16 on the MXU (BN stats / residual stay f32, bounding the error).
    assert jnp.allclose(out, ref, atol=3e-2, rtol=3e-2), f"max abs err {max_err}"

    print("KERNEL_OK")
</pallas_src>

<mosaic_0001>
module attributes {stable_mosaic.version = 11 : i64} {
  func.func @residual_block_kernel(%arg0: memref<4x512xf32, #tpu.memory_space<vmem>>, %arg1: memref<9x512xf32, #tpu.memory_space<vmem>>, %arg2: memref<3x4x12xbf16, #tpu.memory_space<vmem>>, %arg3: memref<3x4x12xbf16, #tpu.memory_space<vmem>>, %arg4: memref<4x1xf32, #tpu.memory_space<vmem>>, %arg5: memref<4x1xf32, #tpu.memory_space<vmem>>, %arg6: memref<4x1xf32, #tpu.memory_space<vmem>>, %arg7: memref<4x1xf32, #tpu.memory_space<vmem>>, %arg8: memref<4x512xf32, #tpu.memory_space<vmem>>) attributes {dimension_semantics = [], scalar_prefetch = 0 : i64, scratch_operands = 0 : i64, tpu.core_type = #tpu.core_type<tc>} {
    %c0 = arith.constant 0 : index
    %c0_0 = arith.constant 0 : index
    %0 = vector.load %arg0[%c0, %c0_0] : memref<4x512xf32, #tpu.memory_space<vmem>>, vector<4x512xf32>
    %c0_1 = arith.constant 0 : index
    %c0_2 = arith.constant 0 : index
    %1 = vector.load %arg1[%c0_1, %c0_2] : memref<9x512xf32, #tpu.memory_space<vmem>>, vector<9x512xf32>
    %c0_3 = arith.constant 0 : index
    %c0_4 = arith.constant 0 : index
    %c0_5 = arith.constant 0 : index
    %2 = vector.load %arg2[%c0_3, %c0_4, %c0_5] : memref<3x4x12xbf16, #tpu.memory_space<vmem>>, vector<3x4x12xbf16>
    %cst = arith.constant 0.000000e+00 : f32
    %3 = vector.broadcast %cst : f32 to vector<4x512xf32>
    %c17_i32 = arith.constant 17 : i32
    %4 = tpu.dynamic_rotate %0 by %c17_i32 dim 1 : vector<4x512xf32>, i32 -> vector<4x512xf32>
    %5 = vector.extract_strided_slice %1 {offsets = [0, 0], sizes = [1, 512], strides = [1, 1]} : vector<9x512xf32> to vector<1x512xf32>
    %6 = vector.broadcast %5 : vector<1x512xf32> to vector<4x512xf32>
    %7 = arith.mulf %4, %6 : vector<4x512xf32>
    %c16_i32 = arith.constant 16 : i32
    %8 = tpu.dynamic_rotate %0 by %c16_i32 dim 1 : vector<4x512xf32>, i32 -> vector<4x512xf32>
    %9 = vector.extract_strided_slice %1 {offsets = [1, 0], sizes = [1, 512], strides = [1, 1]} : vector<9x512xf32> to vector<1x512xf32>
    %10 = vector.broadcast %9 : vector<1x512xf32> to vector<4x512xf32>
    %11 = arith.mulf %8, %10 : vector<4x512xf32>
    %c15_i32 = arith.constant 15 : i32
    %12 = tpu.dynamic_rotate %0 by %c15_i32 dim 1 : vector<4x512xf32>, i32 -> vector<4x512xf32>
    %13 = vector.extract_strided_slice %1 {offsets = [2, 0], sizes = [1, 512], strides = [1, 1]} : vector<9x512xf32> to vector<1x512xf32>
    %14 = vector.broadcast %13 : vector<1x512xf32> to vector<4x512xf32>
    %15 = arith.mulf %12, %14 : vector<4x512xf32>
    %16 = tpu.concatenate %7, %11, %15 in 0 : vector<4x512xf32>, vector<4x512xf32>, vector<4x512xf32> -> vector<12x512xf32>
    %17 = arith.truncf %16 : vector<12x512xf32> to vector<12x512xbf16>
    %18 = vector.extract_strided_slice %2 {offsets = [0, 0, 0], sizes = [1, 4, 12], strides = [1, 1, 1]} : vector<3x4x12xbf16> to vector<1x4x12xbf16>
    %19 = vector.shape_cast %18 : vector<1x4x12xbf16> to vector<4x12xbf16>
    %cst_6 = arith.constant dense<0.000000e+00> : vector<4x512xf32>
    %20 = tpu.matmul %19, %17, %cst_6 {dimension_numbers = #tpu.dot_dimension_numbers<[1], [0], [0], [1], [0, 0, 1, 1], [], []>} : vector<4x12xbf16>, vector<12x512xbf16>, vector<4x512xf32> -> vector<4x512xf32>
    %21 = arith.addf %3, %20 : vector<4x512xf32>
    %c1_i32 = arith.constant 1 : i32
    %22 = tpu.dynamic_rotate %0 by %c1_i32 dim 1 : vector<4x512xf32>, i32 -> vector<4x512xf32>
    %23 = vector.extract_strided_slice %1 {offsets = [3, 0], sizes = [1, 512], strides = [1, 1]} : vector<9x512xf32> to vector<1x512xf32>
    %24 = vector.broadcast %23 : vector<1x512xf32> to vector<4x512xf32>
    %25 = arith.mulf %22, %24 : vector<4x512xf32>
    %26 = vector.extract_strided_slice %1 {offsets = [4, 0], sizes = [1, 512], strides = [1, 1]} : vector<9x512xf32> to vector<1x512xf32>
    %27 = vector.broadcast %26 : vector<1x512xf32> to vector<4x512xf32>
    %28 = arith.mulf %0, %27 : vector<4x512xf32>
    %c511_i32 = arith.constant 511 : i32
    %29 = tpu.dynamic_rotate %0 by %c511_i32 dim 1 : vector<4x512xf32>, i32 -> vector<4x512xf32>
    %30 = vector.extract_strided_slice %1 {offsets = [5, 0], sizes = [1, 512], strides = [1, 1]} : vector<9x512xf32> to vector<1x512xf32>
    %31 = vector.broadcast %30 : vector<1x512xf32> to vector<4x512xf32>
    %32 = arith.mulf %29, %31 : vector<4x512xf32>
    %33 = tpu.concatenate %25, %28, %32 in 0 : vector<4x512xf32>, vector<4x512xf32>, vector<4x512xf32> -> vector<12x512xf32>
    %34 = arith.truncf %33 : vector<12x512xf32> to vector<12x512xbf16>
    %35 = vector.extract_strided_slice %2 {offsets = [1, 0, 0], sizes = [1, 4, 12], strides = [1, 1, 1]} : vector<3x4x12xbf16> to vector<1x4x12xbf16>
    %36 = vector.shape_cast %35 : vector<1x4x12xbf16> to vector<4x12xbf16>
    %cst_7 = arith.constant dense<0.000000e+00> : vector<4x512xf32>
    %37 = tpu.matmul %36, %34, %cst_7 {dimension_numbers = #tpu.dot_dimension_numbers<[1], [0], [0], [1], [0, 0, 1, 1], [], []>} : vector<4x12xbf16>, vector<12x512xbf16>, vector<4x512xf32> -> vector<4x512xf32>
    %38 = arith.addf %21, %37 : vector<4x512xf32>
    %c497_i32 = arith.constant 497 : i32
    %39 = tpu.dynamic_rotate %0 by %c497_i32 dim 1 : vector<4x512xf32>, i32 -> vector<4x512xf32>
    %40 = vector.extract_strided_slice %1 {offsets = [6, 0], sizes = [1, 512], strides = [1, 1]} : vector<9x512xf32> to vector<1x512xf32>
    %41 = vector.broadcast %40 : vector<1x512xf32> to vector<4x512xf32>
    %42 = arith.mulf %39, %41 : vector<4x512xf32>
    %c496_i32 = arith.constant 496 : i32
    %43 = tpu.dynamic_rotate %0 by %c496_i32 dim 1 : vector<4x512xf32>, i32 -> vector<4x512xf32>
    %44 = vector.extract_strided_slice %1 {offsets = [7, 0], sizes = [1, 512], strides = [1, 1]} : vector<9x512xf32> to vector<1x512xf32>
    %45 = vector.broadcast %44 : vector<1x512xf32> to vector<4x512xf32>
    %46 = arith.mulf %43, %45 : vector<4x512xf32>
    %c495_i32 = arith.constant 495 : i32
    %47 = tpu.dynamic_rotate %0 by %c495_i32 dim 1 : vector<4x512xf32>, i32 -> vector<4x512xf32>
    %48 = vector.extract_strided_slice %1 {offsets = [8, 0], sizes = [1, 512], strides = [1, 1]} : vector<9x512xf32> to vector<1x512xf32>
    %49 = vector.broadcast %48 : vector<1x512xf32> to vector<4x512xf32>
    %50 = arith.mulf %47, %49 : vector<4x512xf32>
    %51 = tpu.concatenate %42, %46, %50 in 0 : vector<4x512xf32>, vector<4x512xf32>, vector<4x512xf32> -> vector<12x512xf32>
    %52 = arith.truncf %51 : vector<12x512xf32> to vector<12x512xbf16>
    %53 = vector.extract_strided_slice %2 {offsets = [2, 0, 0], sizes = [1, 4, 12], strides = [1, 1, 1]} : vector<3x4x12xbf16> to vector<1x4x12xbf16>
    %54 = vector.shape_cast %53 : vector<1x4x12xbf16> to vector<4x12xbf16>
    %cst_8 = arith.constant dense<0.000000e+00> : vector<4x512xf32>
    %55 = tpu.matmul %54, %52, %cst_8 {dimension_numbers = #tpu.dot_dimension_numbers<[1], [0], [0], [1], [0, 0, 1, 1], [], []>} : vector<4x12xbf16>, vector<12x512xbf16>, vector<4x512xf32> -> vector<4x512xf32>
    %56 = arith.addf %38, %55 : vector<4x512xf32>
    %cst_9 = arith.constant dense<0.000000e+00> : vector<4xf32>
    %57 = vector.multi_reduction <add>, %56, %cst_9 [1] : vector<4x512xf32> to vector<4xf32>
    %58 = vector.shape_cast %57 : vector<4xf32> to vector<4x1xf32>
    %cst_10 = arith.constant 5.120000e+02 : f32
    %59 = vector.broadcast %cst_10 : f32 to vector<4x1xf32>
    %60 = arith.divf %58, %59 : vector<4x1xf32>
    %61 = vector.broadcast %60 : vector<4x1xf32> to vector<4x512xf32>
    %62 = arith.subf %56, %61 : vector<4x512xf32>
    %63 = arith.mulf %62, %62 : vector<4x512xf32>
    %cst_11 = arith.constant dense<0.000000e+00> : vector<4xf32>
    %64 = vector.multi_reduction <add>, %63, %cst_11 [1] : vector<4x512xf32> to vector<4xf32>
    %65 = vector.shape_cast %64 : vector<4xf32> to vector<4x1xf32>
    %cst_12 = arith.constant 5.120000e+02 : f32
    %66 = vector.broadcast %cst_12 : f32 to vector<4x1xf32>
    %67 = arith.divf %65, %66 : vector<4x1xf32>
    %cst_13 = arith.constant 9.99999974E-6 : f32
    %68 = vector.broadcast %cst_13 : f32 to vector<4x1xf32>
    %69 = arith.addf %67, %68 : vector<4x1xf32>
    %70 = math.rsqrt %69 : vector<4x1xf32>
    %71 = vector.broadcast %70 : vector<4x1xf32> to vector<4x512xf32>
    %72 = arith.mulf %62, %71 : vector<4x512xf32>
    %c0_14 = arith.constant 0 : index
    %c0_15 = arith.constant 0 : index
    %73 = vector.load %arg4[%c0_14, %c0_15] : memref<4x1xf32, #tpu.memory_space<vmem>>, vector<4x1xf32>
    %74 = vector.broadcast %73 : vector<4x1xf32> to vector<4x512xf32>
    %75 = arith.mulf %72, %74 : vector<4x512xf32>
    %c0_16 = arith.constant 0 : index
    %c0_17 = arith.constant 0 : index
    %76 = vector.load %arg5[%c0_16, %c0_17] : memref<4x1xf32, #tpu.memory_space<vmem>>, vector<4x1xf32>
    %77 = vector.broadcast %76 : vector<4x1xf32> to vector<4x512xf32>
    %78 = arith.addf %75, %77 : vector<4x512xf32>
    %cst_18 = arith.constant 0.000000e+00 : f32
    %79 = vector.broadcast %cst_18 : f32 to vector<4x512xf32>
    %80 = arith.maximumf %78, %79 : vector<4x512xf32>
    %c0_19 = arith.constant 0 : index
    %c0_20 = arith.constant 0 : index
    %c0_21 = arith.constant 0 : index
    %81 = vector.load %arg3[%c0_19, %c0_20, %c0_21] : memref<3x4x12xbf16, #tpu.memory_space<vmem>>, vector<3x4x12xbf16>
    %cst_22 = arith.constant 0.000000e+00 : f32
    %82 = vector.broadcast %cst_22 : f32 to vector<4x512xf32>
    %c17_i32_23 = arith.constant 17 : i32
    %83 = tpu.dynamic_rotate %80 by %c17_i32_23 dim 1 : vector<4x512xf32>, i32 -> vector<4x512xf32>
    %84 = vector.extract_strided_slice %1 {offsets = [0, 0], sizes = [1, 512], strides = [1, 1]} : vector<9x512xf32> to vector<1x512xf32>
    %85 = vector.broadcast %84 : vector<1x512xf32> to vector<4x512xf32>
    %86 = arith.mulf %83, %85 : vector<4x512xf32>
    %c16_i32_24 = arith.constant 16 : i32
    %87 = tpu.dynamic_rotate %80 by %c16_i32_24 dim 1 : vector<4x512xf32>, i32 -> vector<4x512xf32>
    %88 = vector.extract_strided_slice %1 {offsets = [1, 0], sizes = [1, 512], strides = [1, 1]} : vector<9x512xf32> to vector<1x512xf32>
    %89 = vector.broadcast %88 : vector<1x512xf32> to vector<4x512xf32>
    %90 = arith.mulf %87, %89 : vector<4x512xf32>
    %c15_i32_25 = arith.constant 15 : i32
    %91 = tpu.dynamic_rotate %80 by %c15_i32_25 dim 1 : vector<4x512xf32>, i32 -> vector<4x512xf32>
    %92 = vector.extract_strided_slice %1 {offsets = [2, 0], sizes = [1, 512], strides = [1, 1]} : vector<9x512xf32> to vector<1x512xf32>
    %93 = vector.broadcast %92 : vector<1x512xf32> to vector<4x512xf32>
    %94 = arith.mulf %91, %93 : vector<4x512xf32>
    %95 = tpu.concatenate %86, %90, %94 in 0 : vector<4x512xf32>, vector<4x512xf32>, vector<4x512xf32> -> vector<12x512xf32>
    %96 = arith.truncf %95 : vector<12x512xf32> to vector<12x512xbf16>
    %97 = vector.extract_strided_slice %81 {offsets = [0, 0, 0], sizes = [1, 4, 12], strides = [1, 1, 1]} : vector<3x4x12xbf16> to vector<1x4x12xbf16>
    %98 = vector.shape_cast %97 : vector<1x4x12xbf16> to vector<4x12xbf16>
    %cst_26 = arith.constant dense<0.000000e+00> : vector<4x512xf32>
    %99 = tpu.matmul %98, %96, %cst_26 {dimension_numbers = #tpu.dot_dimension_numbers<[1], [0], [0], [1], [0, 0, 1, 1], [], []>} : vector<4x12xbf16>, vector<12x512xbf16>, vector<4x512xf32> -> vector<4x512xf32>
    %100 = arith.addf %82, %99 : vector<4x512xf32>
    %c1_i32_27 = arith.constant 1 : i32
    %101 = tpu.dynamic_rotate %80 by %c1_i32_27 dim 1 : vector<4x512xf32>, i32 -> vector<4x512xf32>
    %102 = vector.extract_strided_slice %1 {offsets = [3, 0], sizes = [1, 512], strides = [1, 1]} : vector<9x512xf32> to vector<1x512xf32>
    %103 = vector.broadcast %102 : vector<1x512xf32> to vector<4x512xf32>
    %104 = arith.mulf %101, %103 : vector<4x512xf32>
    %105 = vector.extract_strided_slice %1 {offsets = [4, 0], sizes = [1, 512], strides = [1, 1]} : vector<9x512xf32> to vector<1x512xf32>
    %106 = vector.broadcast %105 : vector<1x512xf32> to vector<4x512xf32>
    %107 = arith.mulf %80, %106 : vector<4x512xf32>
    %c511_i32_28 = arith.constant 511 : i32
    %108 = tpu.dynamic_rotate %80 by %c511_i32_28 dim 1 : vector<4x512xf32>, i32 -> vector<4x512xf32>
    %109 = vector.extract_strided_slice %1 {offsets = [5, 0], sizes = [1, 512], strides = [1, 1]} : vector<9x512xf32> to vector<1x512xf32>
    %110 = vector.broadcast %109 : vector<1x512xf32> to vector<4x512xf32>
    %111 = arith.mulf %108, %110 : vector<4x512xf32>
    %112 = tpu.concatenate %104, %107, %111 in 0 : vector<4x512xf32>, vector<4x512xf32>, vector<4x512xf32> -> vector<12x512xf32>
    %113 = arith.truncf %112 : vector<12x512xf32> to vector<12x512xbf16>
    %114 = vector.extract_strided_slice %81 {offsets = [1, 0, 0], sizes = [1, 4, 12], strides = [1, 1, 1]} : vector<3x4x12xbf16> to vector<1x4x12xbf16>
    %115 = vector.shape_cast %114 : vector<1x4x12xbf16> to vector<4x12xbf16>
    %cst_29 = arith.constant dense<0.000000e+00> : vector<4x512xf32>
    %116 = tpu.matmul %115, %113, %cst_29 {dimension_numbers = #tpu.dot_dimension_numbers<[1], [0], [0], [1], [0, 0, 1, 1], [], []>} : vector<4x12xbf16>, vector<12x512xbf16>, vector<4x512xf32> -> vector<4x512xf32>
    %117 = arith.addf %100, %116 : vector<4x512xf32>
    %c497_i32_30 = arith.constant 497 : i32
    %118 = tpu.dynamic_rotate %80 by %c497_i32_30 dim 1 : vector<4x512xf32>, i32 -> vector<4x512xf32>
    %119 = vector.extract_strided_slice %1 {offsets = [6, 0], sizes = [1, 512], strides = [1, 1]} : vector<9x512xf32> to vector<1x512xf32>
    %120 = vector.broadcast %119 : vector<1x512xf32> to vector<4x512xf32>
    %121 = arith.mulf %118, %120 : vector<4x512xf32>
    %c496_i32_31 = arith.constant 496 : i32
    %122 = tpu.dynamic_rotate %80 by %c496_i32_31 dim 1 : vector<4x512xf32>, i32 -> vector<4x512xf32>
    %123 = vector.extract_strided_slice %1 {offsets = [7, 0], sizes = [1, 512], strides = [1, 1]} : vector<9x512xf32> to vector<1x512xf32>
    %124 = vector.broadcast %123 : vector<1x512xf32> to vector<4x512xf32>
    %125 = arith.mulf %122, %124 : vector<4x512xf32>
    %c495_i32_32 = arith.constant 495 : i32
    %126 = tpu.dynamic_rotate %80 by %c495_i32_32 dim 1 : vector<4x512xf32>, i32 -> vector<4x512xf32>
    %127 = vector.extract_strided_slice %1 {offsets = [8, 0], sizes = [1, 512], strides = [1, 1]} : vector<9x512xf32> to vector<1x512xf32>
    %128 = vector.broadcast %127 : vector<1x512xf32> to vector<4x512xf32>
    %129 = arith.mulf %126, %128 : vector<4x512xf32>
    %130 = tpu.concatenate %121, %125, %129 in 0 : vector<4x512xf32>, vector<4x512xf32>, vector<4x512xf32> -> vector<12x512xf32>
    %131 = arith.truncf %130 : vector<12x512xf32> to vector<12x512xbf16>
    %132 = vector.extract_strided_slice %81 {offsets = [2, 0, 0], sizes = [1, 4, 12], strides = [1, 1, 1]} : vector<3x4x12xbf16> to vector<1x4x12xbf16>
    %133 = vector.shape_cast %132 : vector<1x4x12xbf16> to vector<4x12xbf16>
    %cst_33 = arith.constant dense<0.000000e+00> : vector<4x512xf32>
    %134 = tpu.matmul %133, %131, %cst_33 {dimension_numbers = #tpu.dot_dimension_numbers<[1], [0], [0], [1], [0, 0, 1, 1], [], []>} : vector<4x12xbf16>, vector<12x512xbf16>, vector<4x512xf32> -> vector<4x512xf32>
    %135 = arith.addf %117, %134 : vector<4x512xf32>
    %cst_34 = arith.constant dense<0.000000e+00> : vector<4xf32>
    %136 = vector.multi_reduction <add>, %135, %cst_34 [1] : vector<4x512xf32> to vector<4xf32>
    %137 = vector.shape_cast %136 : vector<4xf32> to vector<4x1xf32>
    %cst_35 = arith.constant 5.120000e+02 : f32
    %138 = vector.broadcast %cst_35 : f32 to vector<4x1xf32>
    %139 = arith.divf %137, %138 : vector<4x1xf32>
    %140 = vector.broadcast %139 : vector<4x1xf32> to vector<4x512xf32>
    %141 = arith.subf %135, %140 : vector<4x512xf32>
    %142 = arith.mulf %141, %141 : vector<4x512xf32>
    %cst_36 = arith.constant dense<0.000000e+00> : vector<4xf32>
    %143 = vector.multi_reduction <add>, %142, %cst_36 [1] : vector<4x512xf32> to vector<4xf32>
    %144 = vector.shape_cast %143 : vector<4xf32> to vector<4x1xf32>
    %cst_37 = arith.constant 5.120000e+02 : f32
    %145 = vector.broadcast %cst_37 : f32 to vector<4x1xf32>
    %146 = arith.divf %144, %145 : vector<4x1xf32>
    %cst_38 = arith.constant 9.99999974E-6 : f32
    %147 = vector.broadcast %cst_38 : f32 to vector<4x1xf32>
    %148 = arith.addf %146, %147 : vector<4x1xf32>
    %149 = math.rsqrt %148 : vector<4x1xf32>
    %150 = vector.broadcast %149 : vector<4x1xf32> to vector<4x512xf32>
    %151 = arith.mulf %141, %150 : vector<4x512xf32>
    %c0_39 = arith.constant 0 : index
    %c0_40 = arith.constant 0 : index
    %152 = vector.load %arg6[%c0_39, %c0_40] : memref<4x1xf32, #tpu.memory_space<vmem>>, vector<4x1xf32>
    %153 = vector.broadcast %152 : vector<4x1xf32> to vector<4x512xf32>
    %154 = arith.mulf %151, %153 : vector<4x512xf32>
    %c0_41 = arith.constant 0 : index
    %c0_42 = arith.constant 0 : index
    %155 = vector.load %arg7[%c0_41, %c0_42] : memref<4x1xf32, #tpu.memory_space<vmem>>, vector<4x1xf32>
    %156 = vector.broadcast %155 : vector<4x1xf32> to vector<4x512xf32>
    %157 = arith.addf %154, %156 : vector<4x512xf32>
    %158 = arith.addf %157, %0 : vector<4x512xf32>
    %cst_43 = arith.constant 0.000000e+00 : f32
    %159 = vector.broadcast %cst_43 : f32 to vector<4x512xf32>
    %160 = arith.maximumf %158, %159 : vector<4x512xf32>
    %c0_44 = arith.constant 0 : index
    %c0_45 = arith.constant 0 : index
    %161 = vector.load %arg8[%c0_44, %c0_45] : memref<4x512xf32, #tpu.memory_space<vmem>>, vector<4x512xf32>
    tpu.vector_store %arg8[%c0_44, %c0_45], %160 {strides = array<i32>} : memref<4x512xf32, #tpu.memory_space<vmem>>, vector<4x512xf32>,
    return
  }
}

</mosaic_0001>

<llo_original>
// kernel: residual_block.1
$region0: #{residual_block.1}
  #allocation0 [shape = 'u32[]', space=smem, size = 0x4, offset = 0x4, fixed_abs, tag = 'smem constant byte address 0x4 - core index']
  #allocation1 [shape = 'u32[144,128]{1,0:T(1,128)}', space=vmem, size = 0x12000, scoped, tag = 'internal scratch']
  %s0 = inlined_call_operand.vmem [shape: f32[4,512], index: 0, kind: input, shape index: {}]
  %s1 = inlined_call_operand.vmem [shape: f32[9,512], index: 1, kind: input, shape index: {}]
  %s2 = inlined_call_operand.vmem [shape: bf16[3,4,12], index: 2, kind: input, shape index: {}]
  %s3 = inlined_call_operand.vmem [shape: bf16[3,4,12], index: 3, kind: input, shape index: {}]
  %s4 = inlined_call_operand.vmem [shape: f32[4,1], index: 4, kind: input, shape index: {}]
  %s5 = inlined_call_operand.vmem [shape: f32[4,1], index: 5, kind: input, shape index: {}]
  %s6 = inlined_call_operand.vmem [shape: f32[4,1], index: 6, kind: input, shape index: {}]
  %s7 = inlined_call_operand.vmem [shape: f32[4,1], index: 7, kind: input, shape index: {}]
  %s8 = inlined_call_operand.vmem [shape: f32[4,512], index: 8, kind: output, shape index: {}]
  %s9 = sld [smem:[#allocation0]]
  $region42: #{residual_block.1} parent=0
    _
  %s11 = ssub.s32 1, %s9
  %s12 = scalar_select 0, %s11, %s9
  // Predicated region
  $region2: #{residual_block.1} parent=0 // pred_check
    _
  $region3: #{residual_block.1} parent=0 // pred_check_branch
    %14 = sbr.rel (0) target = $region5
  $region4: #{residual_block.1} parent=0 // pred_region
    _
  $region5: #{residual_block.1} parent=0 // pred_fallthru
    _
  // Predicated region
  $region6: #{residual_block.1} parent=0 // pred_check
    _
  $region7: #{residual_block.1} parent=0 // pred_check_branch
    %16 = sbr.rel (0) target = $region9
  $region8: #{residual_block.1} parent=0 // pred_region
    _
  $region9: #{residual_block.1} parent=0 // pred_fallthru
    _
  // Predicated region
  $region10: #{residual_block.1} parent=0 // pred_check
    _
  $region11: #{residual_block.1} parent=0 // pred_check_branch
    %18 = sbr.rel (0) target = $region13
  $region12: #{residual_block.1} parent=0 // pred_region
    _
  $region13: #{residual_block.1} parent=0 // pred_fallthru
    _
  // Predicated region
  $region14: #{residual_block.1} parent=0 // pred_check
    _
  $region15: #{residual_block.1} parent=0 // pred_check_branch
    %20 = sbr.rel (0) target = $region17
  $region16: #{residual_block.1} parent=0 // pred_region
    _
  $region17: #{residual_block.1} parent=0 // pred_fallthru
    _
  // Predicated region
  $region18: #{residual_block.1} parent=0 // pred_check
    _
  $region19: #{residual_block.1} parent=0 // pred_check_branch
    %22 = sbr.rel (0) target = $region21
  $region20: #{residual_block.1} parent=0 // pred_region
    _
  $region21: #{residual_block.1} parent=0 // pred_fallthru
    _
  // Predicated region
  $region22: #{residual_block.1} parent=0 // pred_check
    _
  $region23: #{residual_block.1} parent=0 // pred_check_branch
    %24 = sbr.rel (0) target = $region25
  $region24: #{residual_block.1} parent=0 // pred_region
    _
  $region25: #{residual_block.1} parent=0 // pred_fallthru
    _
  // Predicated region
  $region26: #{residual_block.1} parent=0 // pred_check
    _
  $region27: #{residual_block.1} parent=0 // pred_check_branch
    %26 = sbr.rel (0) target = $region29
  $region28: #{residual_block.1} parent=0 // pred_region
    _
  $region29: #{residual_block.1} parent=0 // pred_fallthru
    _
  // Predicated region
  $region30: #{residual_block.1} parent=0 // pred_check
    _
  $region31: #{residual_block.1} parent=0 // pred_check_branch
    %28 = sbr.rel (0) target = $region33
  $region32: #{residual_block.1} parent=0 // pred_region
    _
  $region33: #{residual_block.1} parent=0 // pred_fallthru
    _
  %v30 = vld [vmem:[%s0] sm:$0xff]
  %v31 = vld [vmem:[%s0 + $0x8] sm:$0xff]
  %v32 = vld [vmem:[%s1] sm:$0xff]
  %v33 = vld [vmem:[%s1 + $0x8] sm:$0xff]
  %v34 = vld [vmem:[%s1 + $0x10] sm:$0xff]
  %v35 = vld [vmem:[%s1 + $0x18] sm:$0xff]
  %v36 = vld [vmem:[%s1 + $0x20] sm:$0x1]
  %v37 = vld [vmem:[%s1 + $0x28] sm:$0x1]
  %v38 = vld [vmem:[%s1 + $0x30] sm:$0x1]
  %v39 = vld [vmem:[%s1 + $0x38] sm:$0x1]
  %v40 = vld [vmem:[%s2] sm:$0x3]
  %v41 = vld [vmem:[%s2 + $0x2] sm:$0x3]
  %v42 = vld [vmem:[%s2 + $0x4] sm:$0x3]
  %v45 = vcombine.high %v30, %v30
  %v46 = vcombine.high %v31, %v31
  %49 = vrot.lane.b32.xlu0 %v30, 17
  %v50 = vpop.permute.xlu0 %49
  %51 = vrot.lane.b32.xlu0 %v45, 17
  %v52 = vpop.permute.xlu0 %51
  %53 = vrot.lane.b32.xlu0 %v31, 17
  %v54 = vpop.permute.xlu0 %53
  %55 = vrot.lane.b32.xlu0 %v46, 17
  %v56 = vpop.permute.xlu0 %55
  %v57 = vlaneseq
  %v58 = vand.u32 %v57, 127
  %vm59 = vcmp.lt.s32.totalorder %v58, 17
  %v60 = vsel %vm59, %v54, %v56
  %v61 = vsel %vm59, %v52, %v54
  %v62 = vsel %vm59, %v50, %v52
  %v63 = vsel %vm59, %v56, %v50
  %v64 = vlaneseq
  %v65 = vshrl.u32 %v64, 7
  %v66 = vsub.s32 0, %v65
  %v67 = vrot.slane %v32, %v66
  %v68 = vlaneseq
  %v69 = vshrl.u32 %v68, 7
  %v70 = vsub.s32 0, %v69
  %v71 = vrot.slane %v33, %v70
  %v72 = vlaneseq
  %v73 = vshrl.u32 %v72, 7
  %v74 = vsub.s32 0, %v73
  %v75 = vrot.slane %v34, %v74
  %v76 = vlaneseq
  %v77 = vshrl.u32 %v76, 7
  %v78 = vsub.s32 0, %v77
  %v79 = vrot.slane %v35, %v78
  %v80 = vmul.f32 %v63, %v67
  %v81 = vmul.f32 %v62, %v71
  %v82 = vmul.f32 %v61, %v75
  %v83 = vmul.f32 %v60, %v79
  %84 = vrot.lane.b32.xlu0 %v30, 16
  %v85 = vpop.permute.xlu0 %84
  %86 = vrot.lane.b32.xlu0 %v45, 16
  %v87 = vpop.permute.xlu0 %86
  %88 = vrot.lane.b32.xlu0 %v31, 16
  %v89 = vpop.permute.xlu0 %88
  %90 = vrot.lane.b32.xlu0 %v46, 16
  %v91 = vpop.permute.xlu0 %90
  %vm92 = vcmp.lt.s32.totalorder %v58, 16
  %v93 = vsel %vm92, %v89, %v91
  %v94 = vsel %vm92, %v87, %v89
  %v95 = vsel %vm92, %v85, %v87
  %v96 = vsel %vm92, %v91, %v85
  %v97 = vlaneseq
  %v98 = vshrl.u32 %v97, 7
  %v99 = vsub.s32 1, %v98
  %v100 = vrot.slane %v32, %v99
  %v101 = vlaneseq
  %v102 = vshrl.u32 %v101, 7
  %v103 = vsub.s32 1, %v102
  %v104 = vrot.slane %v33, %v103
  %v105 = vlaneseq
  %v106 = vshrl.u32 %v105, 7
  %v107 = vsub.s32 1, %v106
  %v108 = vrot.slane %v34, %v107
  %v109 = vlaneseq
  %v110 = vshrl.u32 %v109, 7
  %v111 = vsub.s32 1, %v110
  %v112 = vrot.slane %v35, %v111
  %v113 = vmul.f32 %v96, %v100
  %v114 = vmul.f32 %v95, %v104
  %v115 = vmul.f32 %v94, %v108
  %v116 = vmul.f32 %v93, %v112
  %117 = vrot.lane.b32.xlu0 %v30, 15
  %v118 = vpop.permute.xlu0 %117
  %119 = vrot.lane.b32.xlu0 %v45, 15
  %v120 = vpop.permute.xlu0 %119
  %121 = vrot.lane.b32.xlu0 %v31, 15
  %v122 = vpop.permute.xlu0 %121
  %123 = vrot.lane.b32.xlu0 %v46, 15
  %v124 = vpop.permute.xlu0 %123
  %vm125 = vcmp.lt.s32.totalorder %v58, 15
  %v126 = vsel %vm125, %v122, %v124
  %v127 = vsel %vm125, %v120, %v122
  %v128 = vsel %vm125, %v118, %v120
  %v129 = vsel %vm125, %v124, %v118
  %v130 = vlaneseq
  %v131 = vshrl.u32 %v130, 7
  %v132 = vsub.s32 2, %v131
  %v133 = vrot.slane %v32, %v132
  %v134 = vlaneseq
  %v135 = vshrl.u32 %v134, 7
  %v136 = vsub.s32 2, %v135
  %v137 = vrot.slane %v33, %v136
  %v138 = vlaneseq
  %v139 = vshrl.u32 %v138, 7
  %v140 = vsub.s32 2, %v139
  %v141 = vrot.slane %v34, %v140
  %v142 = vlaneseq
  %v143 = vshrl.u32 %v142, 7
  %v144 = vsub.s32 2, %v143
  %v145 = vrot.slane %v35, %v144
  %v146 = vmul.f32 %v129, %v133
  %v147 = vmul.f32 %v128, %v137
  %v148 = vmul.f32 %v127, %v141
  %v149 = vmul.f32 %v126, %v145
  %v154 = vrot.slane %v113, 4
  %v155 = vrot.slane %v114, 4
  %v156 = vrot.slane %v115, 4
  %v157 = vrot.slane %v116, 4
  %vm162 = vcmask 1043456
  %v163 = vsel %vm162, %v80, %v154
  %v164 = vsel %vm162, %v81, %v155
  %v165 = vsel %vm162, %v82, %v156
  %v166 = vsel %vm162, %v83, %v157
  %v167 = vpack.c.bf16 %v146, %v163
  %v168 = vpack.c.bf16 %v147, %v164
  %v169 = vpack.c.bf16 %v148, %v165
  %v170 = vpack.c.bf16 %v149, %v166
  %171 = vrot.lane.b32.xlu0 %v30, 1
  %v172 = vpop.permute.xlu0 %171
  %173 = vrot.lane.b32.xlu0 %v45, 1
  %v174 = vpop.permute.xlu0 %173
  %175 = vrot.lane.b32.xlu0 %v31, 1
  %v176 = vpop.permute.xlu0 %175
  %177 = vrot.lane.b32.xlu0 %v46, 1
  %v178 = vpop.permute.xlu0 %177
  %vm179 = vcmp.lt.s32.totalorder %v58, 1
  %v180 = vsel %vm179, %v176, %v178
  %v181 = vsel %vm179, %v174, %v176
  %v182 = vsel %vm179, %v172, %v174
  %v183 = vsel %vm179, %v178, %v172
  %v184 = vlaneseq
  %v185 = vshrl.u32 %v184, 7
  %v186 = vsub.s32 3, %v185
  %v187 = vrot.slane %v32, %v186
  %v188 = vlaneseq
  %v189 = vshrl.u32 %v188, 7
  %v190 = vsub.s32 3, %v189
  %v191 = vrot.slane %v33, %v190
  %v192 = vlaneseq
  %v193 = vshrl.u32 %v192, 7
  %v194 = vsub.s32 3, %v193
  %v195 = vrot.slane %v34, %v194
  %v196 = vlaneseq
  %v197 = vshrl.u32 %v196, 7
  %v198 = vsub.s32 3, %v197
  %v199 = vrot.slane %v35, %v198
  %v200 = vmul.f32 %v183, %v187
  %v201 = vmul.f32 %v182, %v191
  %v202 = vmul.f32 %v181, %v195
  %v203 = vmul.f32 %v180, %v199
  %v204 = vlaneseq
  %v205 = vshrl.u32 %v204, 7
  %v206 = vsub.s32 4, %v205
  %v207 = vrot.slane %v32, %v206
  %v208 = vlaneseq
  %v209 = vshrl.u32 %v208, 7
  %v210 = vsub.s32 4, %v209
  %v211 = vrot.slane %v33, %v210
  %v212 = vlaneseq
  %v213 = vshrl.u32 %v212, 7
  %v214 = vsub.s32 4, %v213
  %v215 = vrot.slane %v34, %v214
  %v216 = vlaneseq
  %v217 = vshrl.u32 %v216, 7
  %v218 = vsub.s32 4, %v217
  %v219 = vrot.slane %v35, %v218
  %v224 = vcombine.low %v207, %v211
  %v225 = vcombine.low %v215, %v219
  %v228 = vmul.f32 %v30, %v224
  %v229 = vmul.f32 %v31, %v225
  %230 = vrot.lane.b32.xlu0 %v30, 127
  %v231 = vpop.permute.xlu0 %230
  %232 = vrot.lane.b32.xlu0 %v45, 127
  %v233 = vpop.permute.xlu0 %232
  %234 = vrot.lane.b32.xlu0 %v31, 127
  %v235 = vpop.permute.xlu0 %234
  %236 = vrot.lane.b32.xlu0 %v46, 127
  %v237 = vpop.permute.xlu0 %236
  %vm238 = vcmp.lt.s32.totalorder %v58, 127
  %v239 = vsel %vm238, %v235, %v237
  %v240 = vsel %vm238, %v233, %v235
  %v241 = vsel %vm238, %v231, %v233
  %v242 = vsel %vm238, %v237, %v231
  %v243 = vlaneseq
  %v244 = vshrl.u32 %v243, 7
  %v245 = vsub.s32 5, %v244
  %v246 = vrot.slane %v32, %v245
  %v247 = vlaneseq
  %v248 = vshrl.u32 %v247, 7
  %v249 = vsub.s32 5, %v248
  %v250 = vrot.slane %v33, %v249
  %v251 = vlaneseq
  %v252 = vshrl.u32 %v251, 7
  %v253 = vsub.s32 5, %v252
  %v254 = vrot.slane %v34, %v253
  %v255 = vlaneseq
  %v256 = vshrl.u32 %v255, 7
  %v257 = vsub.s32 5, %v256
  %v258 = vrot.slane %v35, %v257
  %v259 = vmul.f32 %v241, %v246
  %v260 = vmul.f32 %v240, %v250
  %v261 = vmul.f32 %v239, %v254
  %v262 = vmul.f32 %v242, %v258
  %v265 = vcombine.low %v228, %v228
  %v266 = vcombine.low %v229, %v229
  %v269 = vsel %vm162, %v200, %v265
  %v270 = vsel %vm162, %v201, %v228
  %v271 = vsel %vm162, %v202, %v266
  %v272 = vsel %vm162, %v203, %v229
  %v273 = vpack.c.bf16 %v259, %v269
  %v274 = vpack.c.bf16 %v260, %v270
  %v275 = vpack.c.bf16 %v261, %v271
  %v276 = vpack.c.bf16 %v262, %v272
  %vm277 = vcmask 97280
  %v279 = vsel %vm277, %v41, 0
  %vm281 = vcmask 1045504
  %v283 = vsel %vm281, %v273, 0
  %v286 = vsel %vm281, %v274, 0
  %v289 = vsel %vm281, %v275, 0
  %v292 = vsel %vm281, %v276, 0
  %294 = vmatprep.subr.bf16.mxu0 %v286
  %295 = vmatpush1.bf16.msra.mxu0 %v283
  %296 = vmatprep.subr.bf16.mxu0 0
  %297 = vmatpush1.bf16.msra.mxu0 0
  %298 = vmatprep.subr.bf16.mxu0 0
  %299 = vmatpush1.bf16.msra.mxu0 0
  %300 = vmatprep.subr.bf16.mxu0 0
  %301 = vmatpush1.bf16.msra.mxu0 0
  %302 = vmatprep.subr.bf16.mxu0 0
  %303 = vmatpush1.bf16.msra.mxu0 0
  %304 = vmatprep.subr.bf16.mxu0 0
  %305 = vmatpush1.bf16.msra.mxu0 0
  %306 = vmatprep.subr.bf16.mxu0 0
  %307 = vmatpush1.bf16.msra.mxu0 0
  %308 = vmatprep.subr.bf16.mxu0 0
  %309 = vmatpush1.bf16.msra.mxu0 0
  %310 = vmatprep.subr.bf16.mxu0 0
  %311 = vmatpush1.bf16.msra.mxu0 0
  %312 = vmatprep.subr.bf16.mxu0 0
  %313 = vmatpush1.bf16.msra.mxu0 0
  %314 = vmatprep.subr.bf16.mxu0 0
  %315 = vmatpush1.bf16.msra.mxu0 0
  %316 = vmatprep.subr.bf16.mxu0 0
  %317 = vmatpush1.bf16.msra.mxu0 0
  %318 = vmatprep.subr.bf16.mxu0 0
  %319 = vmatpush1.bf16.msra.mxu0 0
  %320 = vmatprep.subr.bf16.mxu0 0
  %321 = vmatpush1.bf16.msra.mxu0 0
  %322 = vmatprep.subr.bf16.mxu0 0
  %323 = vmatpush1.bf16.msra.mxu0 0
  %324 = vmatprep.subr.bf16.mxu0 0
  %325 = vmatpush1.bf16.msra.mxu0 0
  %326 = vmatprep.mubr.bf16.mxu0 0
  %327 = vmatmul.mubr.bf16.gmra.mrb[0].mxu0 %v279
  %v328 = vpop.f32.mrb[0].mxu0
  %v329 = vadd.f32 0.0, %v328
  %v330 = vpop.f32.mrb[0].mxu0
  %v331 = vadd.f32 0.0, %v330
  %v332 = vpop.f32.mrb[0].mxu0
  %v333 = vpop.f32.mrb[0].mxu0
  %334 = vdwg.mxu0
  %335 = vmatprep.subr.bf16.mxu0 %v292
  %336 = vmatpush1.bf16.msra.mxu0 %v289
  %337 = vmatprep.subr.bf16.mxu0 0
  %338 = vmatpush1.bf16.msra.mxu0 0
  %339 = vmatprep.subr.bf16.mxu0 0
  %340 = vmatpush1.bf16.msra.mxu0 0
  %341 = vmatprep.subr.bf16.mxu0 0
  %342 = vmatpush1.bf16.msra.mxu0 0
  %343 = vmatprep.subr.bf16.mxu0 0
  %344 = vmatpush1.bf16.msra.mxu0 0
  %345 = vmatprep.subr.bf16.mxu0 0
  %346 = vmatpush1.bf16.msra.mxu0 0
  %347 = vmatprep.subr.bf16.mxu0 0
  %348 = vmatpush1.bf16.msra.mxu0 0
  %349 = vmatprep.subr.bf16.mxu0 0
  %350 = vmatpush1.bf16.msra.mxu0 0
  %351 = vmatprep.subr.bf16.mxu0 0
  %352 = vmatpush1.bf16.msra.mxu0 0
  %353 = vmatprep.subr.bf16.mxu0 0
  %354 = vmatpush1.bf16.msra.mxu0 0
  %355 = vmatprep.subr.bf16.mxu0 0
  %356 = vmatpush1.bf16.msra.mxu0 0
  %357 = vmatprep.subr.bf16.mxu0 0
  %358 = vmatpush1.bf16.msra.mxu0 0
  %359 = vmatprep.subr.bf16.mxu0 0
  %360 = vmatpush1.bf16.msra.mxu0 0
  %361 = vmatprep.subr.bf16.mxu0 0
  %362 = vmatpush1.bf16.msra.mxu0 0
  %363 = vmatprep.subr.bf16.mxu0 0
  %364 = vmatpush1.bf16.msra.mxu0 0
  %365 = vmatprep.subr.bf16.mxu0 0
  %366 = vmatpush1.bf16.msra.mxu0 0
  %367 = vmatprep.mubr.bf16.mxu0 0
  %368 = vmatmul.mubr.bf16.gmra.mrb[0].mxu0 %v279
  %v369 = vpop.f32.mrb[0].mxu0
  %v370 = vadd.f32 0.0, %v369
  %v371 = vpop.f32.mrb[0].mxu0
  %v372 = vadd.f32 0.0, %v371
  %v373 = vpop.f32.mrb[0].mxu0
  %v374 = vpop.f32.mrb[0].mxu0
  %375 = vdwg.mxu0
  %v377 = vsel %vm277, %v40, 0
  %v380 = vsel %vm281, %v167, 0
  %v383 = vsel %vm281, %v168, 0
  %v386 = vsel %vm281, %v169, 0
  %v389 = vsel %vm281, %v170, 0
  %391 = vmatprep.subr.bf16.mxu0 %v383
  %392 = vmatpush1.bf16.msra.mxu0 %v380
  %393 = vmatprep.subr.bf16.mxu0 0
  %394 = vmatpush1.bf16.msra.mxu0 0
  %395 = vmatprep.subr.bf16.mxu0 0
  %396 = vmatpush1.bf16.msra.mxu0 0
  %397 = vmatprep.subr.bf16.mxu0 0
  %398 = vmatpush1.bf16.msra.mxu0 0
  %399 = vmatprep.subr.bf16.mxu0 0
  %400 = vmatpush1.bf16.msra.mxu0 0
  %401 = vmatprep.subr.bf16.mxu0 0
  %402 = vmatpush1.bf16.msra.mxu0 0
  %403 = vmatprep.subr.bf16.mxu0 0
  %404 = vmatpush1.bf16.msra.mxu0 0
  %405 = vmatprep.subr.bf16.mxu0 0
  %406 = vmatpush1.bf16.msra.mxu0 0
  %407 = vmatprep.subr.bf16.mxu0 0
  %408 = vmatpush1.bf16.msra.mxu0 0
  %409 = vmatprep.subr.bf16.mxu0 0
  %410 = vmatpush1.bf16.msra.mxu0 0
  %411 = vmatprep.subr.bf16.mxu0 0
  %412 = vmatpush1.bf16.msra.mxu0 0
  %413 = vmatprep.subr.bf16.mxu0 0
  %414 = vmatpush1.bf16.msra.mxu0 0
  %415 = vmatprep.subr.bf16.mxu0 0
  %416 = vmatpush1.bf16.msra.mxu0 0
  %417 = vmatprep.subr.bf16.mxu0 0
  %418 = vmatpush1.bf16.msra.mxu0 0
  %419 = vmatprep.subr.bf16.mxu0 0
  %420 = vmatpush1.bf16.msra.mxu0 0
  %421 = vmatprep.subr.bf16.mxu0 0
  %422 = vmatpush1.bf16.msra.mxu0 0
  %423 = vmatprep.mubr.bf16.mxu0 0
  %424 = vmatmul.mubr.bf16.gmra.mrb[0].mxu0 %v377
  %v425 = vpop.f32.mrb[0].mxu0
  %v426 = vadd.f32 %v329, %v425
  %v427 = vpop.f32.mrb[0].mxu0
  %v428 = vadd.f32 %v331, %v427
  %v429 = vpop.f32.mrb[0].mxu0
  %v430 = vpop.f32.mrb[0].mxu0
  %431 = vdwg.mxu0
  %432 = vmatprep.subr.bf16.mxu0 %v389
  %433 = vmatpush1.bf16.msra.mxu0 %v386
  %434 = vmatprep.subr.bf16.mxu0 0
  %435 = vmatpush1.bf16.msra.mxu0 0
  %436 = vmatprep.subr.bf16.mxu0 0
  %437 = vmatpush1.bf16.msra.mxu0 0
  %438 = vmatprep.subr.bf16.mxu0 0
  %439 = vmatpush1.bf16.msra.mxu0 0
  %440 = vmatprep.subr.bf16.mxu0 0
  %441 = vmatpush1.bf16.msra.mxu0 0
  %442 = vmatprep.subr.bf16.mxu0 0
  %443 = vmatpush1.bf16.msra.mxu0 0
  %444 = vmatprep.subr.bf16.mxu0 0
  %445 = vmatpush1.bf16.msra.mxu0 0
  %446 = vmatprep.subr.bf16.mxu0 0
  %447 = vmatpush1.bf16.msra.mxu0 0
  %448 = vmatprep.subr.bf16.mxu0 0
  %449 = vmatpush1.bf16.msra.mxu0 0
  %450 = vmatprep.subr.bf16.mxu0 0
  %451 = vmatpush1.bf16.msra.mxu0 0
  %452 = vmatprep.subr.bf16.mxu0 0
  %453 = vmatpush1.bf16.msra.mxu0 0
  %454 = vmatprep.subr.bf16.mxu0 0
  %455 = vmatpush1.bf16.msra.mxu0 0
  %456 = vmatprep.subr.bf16.mxu0 0
  %457 = vmatpush1.bf16.msra.mxu0 0
  %458 = vmatprep.subr.bf16.mxu0 0
  %459 = vmatpush1.bf16.msra.mxu0 0
  %460 = vmatprep.subr.bf16.mxu0 0
  %461 = vmatpush1.bf16.msra.mxu0 0
  %462 = vmatprep.subr.bf16.mxu0 0
  %463 = vmatpush1.bf16.msra.mxu0 0
  %464 = vmatprep.mubr.bf16.mxu0 0
  %465 = vmatmul.mubr.bf16.gmra.mrb[0].mxu0 %v377
  %v466 = vpop.f32.mrb[0].mxu0
  %v467 = vadd.f32 %v370, %v466
  %v468 = vpop.f32.mrb[0].mxu0
  %v469 = vadd.f32 %v372, %v468
  %v470 = vpop.f32.mrb[0].mxu0
  %v471 = vpop.f32.mrb[0].mxu0
  %472 = vdwg.mxu0
  %473 = vrot.lane.b32.xlu0 %v30, 113
  %v474 = vpop.permute.xlu0 %473
  %475 = vrot.lane.b32.xlu0 %v45, 113
  %v476 = vpop.permute.xlu0 %475
  %477 = vrot.lane.b32.xlu0 %v31, 113
  %v478 = vpop.permute.xlu0 %477
  %479 = vrot.lane.b32.xlu0 %v46, 113
  %v480 = vpop.permute.xlu0 %479
  %vm481 = vcmp.lt.s32.totalorder %v58, 113
  %v482 = vsel %vm481, %v478, %v480
  %v483 = vsel %vm481, %v476, %v478
  %v484 = vsel %vm481, %v474, %v476
  %v485 = vsel %vm481, %v480, %v474
  %v486 = vlaneseq
  %v487 = vshrl.u32 %v486, 7
  %v488 = vsub.s32 6, %v487
  %v489 = vrot.slane %v32, %v488
  %v490 = vlaneseq
  %v491 = vshrl.u32 %v490, 7
  %v492 = vsub.s32 6, %v491
  %v493 = vrot.slane %v33, %v492
  %v494 = vlaneseq
  %v495 = vshrl.u32 %v494, 7
  %v496 = vsub.s32 6, %v495
  %v497 = vrot.slane %v34, %v496
  %v498 = vlaneseq
  %v499 = vshrl.u32 %v498, 7
  %v500 = vsub.s32 6, %v499
  %v501 = vrot.slane %v35, %v500
  %v502 = vmul.f32 %v484, %v489
  %v503 = vmul.f32 %v483, %v493
  %v504 = vmul.f32 %v482, %v497
  %v505 = vmul.f32 %v485, %v501
  %506 = vrot.lane.b32.xlu0 %v30, 112
  %v507 = vpop.permute.xlu0 %506
  %508 = vrot.lane.b32.xlu0 %v45, 112
  %v509 = vpop.permute.xlu0 %508
  %510 = vrot.lane.b32.xlu0 %v31, 112
  %v511 = vpop.permute.xlu0 %510
  %512 = vrot.lane.b32.xlu0 %v46, 112
  %v513 = vpop.permute.xlu0 %512
  %vm514 = vcmp.lt.s32.totalorder %v58, 112
  %v515 = vsel %vm514, %v511, %v513
  %v516 = vsel %vm514, %v509, %v511
  %v517 = vsel %vm514, %v507, %v509
  %v518 = vsel %vm514, %v513, %v507
  %v519 = vlaneseq
  %v520 = vshrl.u32 %v519, 7
  %v521 = vsub.s32 7, %v520
  %v522 = vrot.slane %v32, %v521
  %v523 = vlaneseq
  %v524 = vshrl.u32 %v523, 7
  %v525 = vsub.s32 7, %v524
  %v526 = vrot.slane %v33, %v525
  %v527 = vlaneseq
  %v528 = vshrl.u32 %v527, 7
  %v529 = vsub.s32 7, %v528
  %v530 = vrot.slane %v34, %v529
  %v531 = vlaneseq
  %v532 = vshrl.u32 %v531, 7
  %v533 = vsub.s32 7, %v532
  %v534 = vrot.slane %v35, %v533
  %v535 = vmul.f32 %v517, %v522
  %v536 = vmul.f32 %v516, %v526
  %v537 = vmul.f32 %v515, %v530
  %v538 = vmul.f32 %v518, %v534
  %539 = vrot.lane.b32.xlu0 %v30, 111
  %v540 = vpop.permute.xlu0 %539
  %541 = vrot.lane.b32.xlu0 %v45, 111
  %v542 = vpop.permute.xlu0 %541
  %543 = vrot.lane.b32.xlu0 %v31, 111
  %v544 = vpop.permute.xlu0 %543
  %545 = vrot.lane.b32.xlu0 %v46, 111
  %v546 = vpop.permute.xlu0 %545
  %vm547 = vcmp.lt.s32.totalorder %v58, 111
  %v548 = vsel %vm547, %v544, %v546
  %v549 = vsel %vm547, %v542, %v544
  %v550 = vsel %vm547, %v540, %v542
  %v551 = vsel %vm547, %v546, %v540
  %v552 = vlaneseq
  %v553 = vshrl.u32 %v552, 7
  %v554 = vsub.s32 0, %v553
  %v555 = vrot.slane %v36, %v554
  %v556 = vlaneseq
  %v557 = vshrl.u32 %v556, 7
  %v558 = vsub.s32 0, %v557
  %v559 = vrot.slane %v37, %v558
  %v560 = vlaneseq
  %v561 = vshrl.u32 %v560, 7
  %v562 = vsub.s32 0, %v561
  %v563 = vrot.slane %v38, %v562
  %v564 = vlaneseq
  %v565 = vshrl.u32 %v564, 7
  %v566 = vsub.s32 0, %v565
  %v567 = vrot.slane %v39, %v566
  %v568 = vmul.f32 %v550, %v555
  %v569 = vmul.f32 %v549, %v559
  %v570 = vmul.f32 %v548, %v563
  %v571 = vmul.f32 %v551, %v567
  %v576 = vrot.slane %v535, 4
  %v577 = vrot.slane %v536, 4
  %v578 = vrot.slane %v537, 4
  %v579 = vrot.slane %v538, 4
  %v584 = vsel %vm162, %v502, %v576
  %v585 = vsel %vm162, %v503, %v577
  %v586 = vsel %vm162, %v504, %v578
  %v587 = vsel %vm162, %v505, %v579
  %v588 = vpack.c.bf16 %v568, %v584
  %v589 = vpack.c.bf16 %v569, %v585
  %v590 = vpack.c.bf16 %v570, %v586
  %v591 = vpack.c.bf16 %v571, %v587
  %v593 = vsel %vm277, %v42, 0
  %v596 = vsel %vm281, %v588, 0
  %v599 = vsel %vm281, %v589, 0
  %v602 = vsel %vm281, %v590, 0
  %v605 = vsel %vm281, %v591, 0
  %607 = vmatprep.subr.bf16.mxu0 %v599
  %608 = vmatpush1.bf16.msra.mxu0 %v596
  %609 = vmatprep.subr.bf16.mxu0 0
  %610 = vmatpush1.bf16.msra.mxu0 0
  %611 = vmatprep.subr.bf16.mxu0 0
  %612 = vmatpush1.bf16.msra.mxu0 0
  %613 = vmatprep.subr.bf16.mxu0 0
  %614 = vmatpush1.bf16.msra.mxu0 0
  %615 = vmatprep.subr.bf16.mxu0 0
  %616 = vmatpush1.bf16.msra.mxu0 0
  %617 = vmatprep.subr.bf16.mxu0 0
  %618 = vmatpush1.bf16.msra.mxu0 0
  %619 = vmatprep.subr.bf16.mxu0 0
  %620 = vmatpush1.bf16.msra.mxu0 0
  %621 = vmatprep.subr.bf16.mxu0 0
  %622 = vmatpush1.bf16.msra.mxu0 0
  %623 = vmatprep.subr.bf16.mxu0 0
  %624 = vmatpush1.bf16.msra.mxu0 0
  %625 = vmatprep.subr.bf16.mxu0 0
  %626 = vmatpush1.bf16.msra.mxu0 0
  %627 = vmatprep.subr.bf16.mxu0 0
  %628 = vmatpush1.bf16.msra.mxu0 0
  %629 = vmatprep.subr.bf16.mxu0 0
  %630 = vmatpush1.bf16.msra.mxu0 0
  %631 = vmatprep.subr.bf16.mxu0 0
  %632 = vmatpush1.bf16.msra.mxu0 0
  %633 = vmatprep.subr.bf16.mxu0 0
  %634 = vmatpush1.bf16.msra.mxu0 0
  %635 = vmatprep.subr.bf16.mxu0 0
  %636 = vmatpush1.bf16.msra.mxu0 0
  %637 = vmatprep.subr.bf16.mxu0 0
  %638 = vmatpush1.bf16.msra.mxu0 0
  %639 = vmatprep.mubr.bf16.mxu0 0
  %640 = vmatmul.mubr.bf16.gmra.mrb[0].mxu0 %v593
  %v641 = vpop.f32.mrb[0].mxu0
  %v642 = vadd.f32 0.0, %v641
  %v643 = vpop.f32.mrb[0].mxu0
  %v644 = vadd.f32 0.0, %v643
  %v645 = vpop.f32.mrb[0].mxu0
  %v646 = vpop.f32.mrb[0].mxu0
  %647 = vdwg.mxu0
  %648 = vmatprep.subr.bf16.mxu0 %v605
  %649 = vmatpush1.bf16.msra.mxu0 %v602
  %650 = vmatprep.subr.bf16.mxu0 0
  %651 = vmatpush1.bf16.msra.mxu0 0
  %652 = vmatprep.subr.bf16.mxu0 0
  %653 = vmatpush1.bf16.msra.mxu0 0
  %654 = vmatprep.subr.bf16.mxu0 0
  %655 = vmatpush1.bf16.msra.mxu0 0
  %656 = vmatprep.subr.bf16.mxu0 0
  %657 = vmatpush1.bf16.msra.mxu0 0
  %658 = vmatprep.subr.bf16.mxu0 0
  %659 = vmatpush1.bf16.msra.mxu0 0
  %660 = vmatprep.subr.bf16.mxu0 0
  %661 = vmatpush1.bf16.msra.mxu0 0
  %662 = vmatprep.subr.bf16.mxu0 0
  %663 = vmatpush1.bf16.msra.mxu0 0
  %664 = vmatprep.subr.bf16.mxu0 0
  %665 = vmatpush1.bf16.msra.mxu0 0
  %666 = vmatprep.subr.bf16.mxu0 0
  %667 = vmatpush1.bf16.msra.mxu0 0
  %668 = vmatprep.subr.bf16.mxu0 0
  %669 = vmatpush1.bf16.msra.mxu0 0
  %670 = vmatprep.subr.bf16.mxu0 0
  %671 = vmatpush1.bf16.msra.mxu0 0
  %672 = vmatprep.subr.bf16.mxu0 0
  %673 = vmatpush1.bf16.msra.mxu0 0
  %674 = vmatprep.subr.bf16.mxu0 0
  %675 = vmatpush1.bf16.msra.mxu0 0
  %676 = vmatprep.subr.bf16.mxu0 0
  %677 = vmatpush1.bf16.msra.mxu0 0
  %678 = vmatprep.subr.bf16.mxu0 0
  %679 = vmatpush1.bf16.msra.mxu0 0
  %680 = vmatprep.mubr.bf16.mxu0 0
  %681 = vmatmul.mubr.bf16.gmra.mrb[0].mxu0 %v593
  %v682 = vpop.f32.mrb[0].mxu0
  %v683 = vadd.f32 0.0, %v682
  %v684 = vpop.f32.mrb[0].mxu0
  %v685 = vadd.f32 0.0, %v684
  %v686 = vpop.f32.mrb[0].mxu0
  %v687 = vpop.f32.mrb[0].mxu0
  %688 = vdwg.mxu0
  %v689 = vadd.f32 %v426, %v642
  %v690 = vadd.f32 %v428, %v644
  %v691 = vadd.f32 %v467, %v683
  %v692 = vadd.f32 %v469, %v685
  %v693 = vsel %vm162, %v689, 0.0
  %v694 = vsel %vm162, %v690, 0.0
  %v695 = vadd.f32 %v693, %v694
  %v696 = vsel %vm162, %v691, 0.0
  %v697 = vadd.f32 %v695, %v696
  %v698 = vsel %vm162, %v692, 0.0
  %v699 = vadd.f32 %v697, %v698
  %700 = vadd.xlane.f32.xlu0 %v699
  %v701 = vpop.xlane.xlu0 %700
  %v702 = vrcp.pop 512.0
  %v703 = vmul.f32 %v701, %v702
  %v704 = vsub.f32 %v689, %v703
  %v705 = vsub.f32 %v690, %v703
  %v706 = vsub.f32 %v691, %v703
  %v707 = vsub.f32 %v692, %v703
  %v708 = vmul.f32 %v704, %v704
  %v709 = vmul.f32 %v705, %v705
  %v710 = vmul.f32 %v706, %v706
  %v711 = vmul.f32 %v707, %v707
  %v712 = vsel %vm162, %v708, 0.0
  %v713 = vsel %vm162, %v709, 0.0
  %v714 = vadd.f32 %v712, %v713
  %v715 = vsel %vm162, %v710, 0.0
  %v716 = vadd.f32 %v714, %v715
  %v717 = vsel %vm162, %v711, 0.0
  %v718 = vadd.f32 %v716, %v717
  %719 = vadd.xlane.f32.xlu0 %v718
  %v720 = vpop.xlane.xlu0 %719
  %v721 = vmul.f32 %v720, %v702
  %v722 = vadd.f32 %v721, 1e-05
  %v723 = vrsqrt.pop %v722
  %v724 = vmul.f32 %v704, %v723
  %v725 = vmul.f32 %v705, %v723
  %v726 = vmul.f32 %v706, %v723
  %v727 = vmul.f32 %v707, %v723
  %v728 = vld [vmem:[%s4] sm:$0xf]
  %730 = vset.pattern.permute.xlu0 0
  %731 = vperm.xlu0 %730, %v728
  %v732 = vpop.permute.xlu0 %731
  %v734 = vmul.f32 %v724, %v732
  %v735 = vmul.f32 %v725, %v732
  %v736 = vmul.f32 %v726, %v732
  %v737 = vmul.f32 %v727, %v732
  %v738 = vld [vmem:[%s5] sm:$0xf]
  %740 = vset.pattern.permute.xlu0 0
  %741 = vperm.xlu0 %740, %v738
  %v742 = vpop.permute.xlu0 %741
  %v744 = vadd.f32 %v734, %v742
  %v745 = vadd.f32 %v735, %v742
  %v746 = vadd.f32 %v736, %v742
  %v747 = vadd.f32 %v737, %v742
  %v748 = vmax.f32 %v744, 0.0
  %v749 = vmax.f32 %v745, 0.0
  %v750 = vmax.f32 %v746, 0.0
  %v751 = vmax.f32 %v747, 0.0
  %v752 = vld [vmem:[%s3] sm:$0x3]
  %v753 = vld [vmem:[%s3 + $0x2] sm:$0x3]
  %v754 = vld [vmem:[%s3 + $0x4] sm:$0x3]
  %755 = vrot.lane.b32.xlu0 %v748, 17
  %v756 = vpop.permute.xlu0 %755
  %757 = vrot.lane.b32.xlu0 %v749, 17
  %v758 = vpop.permute.xlu0 %757
  %759 = vrot.lane.b32.xlu0 %v750, 17
  %v760 = vpop.permute.xlu0 %759
  %761 = vrot.lane.b32.xlu0 %v751, 17
  %v762 = vpop.permute.xlu0 %761
  %v763 = vsel %vm59, %v760, %v762
  %v764 = vsel %vm59, %v758, %v760
  %v765 = vsel %vm59, %v756, %v758
  %v766 = vsel %vm59, %v762, %v756
  %v767 = vmul.f32 %v766, %v67
  %v768 = vmul.f32 %v765, %v71
  %v769 = vmul.f32 %v764, %v75
  %v770 = vmul.f32 %v763, %v79
  %771 = vrot.lane.b32.xlu0 %v748, 16
  %v772 = vpop.permute.xlu0 %771
  %773 = vrot.lane.b32.xlu0 %v749, 16
  %v774 = vpop.permute.xlu0 %773
  %775 = vrot.lane.b32.xlu0 %v750, 16
  %v776 = vpop.permute.xlu0 %775
  %777 = vrot.lane.b32.xlu0 %v751, 16
  %v778 = vpop.permute.xlu0 %777
  %v779 = vsel %vm92, %v776, %v778
  %v780 = vsel %vm92, %v774, %v776
  %v781 = vsel %vm92, %v772, %v774
  %v782 = vsel %vm92, %v778, %v772
  %v783 = vmul.f32 %v782, %v100
  %v784 = vmul.f32 %v781, %v104
  %v785 = vmul.f32 %v780, %v108
  %v786 = vmul.f32 %v779, %v112
  %787 = vrot.lane.b32.xlu0 %v748, 15
  %v788 = vpop.permute.xlu0 %787
  %789 = vrot.lane.b32.xlu0 %v749, 15
  %v790 = vpop.permute.xlu0 %789
  %791 = vrot.lane.b32.xlu0 %v750, 15
  %v792 = vpop.permute.xlu0 %791
  %793 = vrot.lane.b32.xlu0 %v751, 15
  %v794 = vpop.permute.xlu0 %793
  %v795 = vsel %vm125, %v792, %v794
  %v796 = vsel %vm125, %v790, %v792
  %v797 = vsel %vm125, %v788, %v790
  %v798 = vsel %vm125, %v794, %v788
  %v799 = vmul.f32 %v798, %v133
  %v800 = vmul.f32 %v797, %v137
  %v801 = vmul.f32 %v796, %v141
  %v802 = vmul.f32 %v795, %v145
  %v807 = vrot.slane %v783, 4
  %v808 = vrot.slane %v784, 4
  %v809 = vrot.slane %v785, 4
  %v810 = vrot.slane %v786, 4
  %v815 = vsel %vm162, %v767, %v807
  %v816 = vsel %vm162, %v768, %v808
  %v817 = vsel %vm162, %v769, %v809
  %v818 = vsel %vm162, %v770, %v810
  %v819 = vpack.c.bf16 %v799, %v815
  %v820 = vpack.c.bf16 %v800, %v816
  %v821 = vpack.c.bf16 %v801, %v817
  %v822 = vpack.c.bf16 %v802, %v818
  %823 = vrot.lane.b32.xlu0 %v748, 1
  %v824 = vpop.permute.xlu0 %823
  %825 = vrot.lane.b32.xlu0 %v749, 1
  %v826 = vpop.permute.xlu0 %825
  %827 = vrot.lane.b32.xlu0 %v750, 1
  %v828 = vpop.permute.xlu0 %827
  %829 = vrot.lane.b32.xlu0 %v751, 1
  %v830 = vpop.permute.xlu0 %829
  %v831 = vsel %vm179, %v828, %v830
  %v832 = vsel %vm179, %v826, %v828
  %v833 = vsel %vm179, %v824, %v826
  %v834 = vsel %vm179, %v830, %v824
  %v835 = vmul.f32 %v834, %v187
  %v836 = vmul.f32 %v833, %v191
  %v837 = vmul.f32 %v832, %v195
  %v838 = vmul.f32 %v831, %v199
  %v839 = vmul.f32 %v748, %v207
  %v840 = vmul.f32 %v749, %v211
  %v841 = vmul.f32 %v750, %v215
  %v842 = vmul.f32 %v751, %v219
  %843 = vrot.lane.b32.xlu0 %v748, 127
  %v844 = vpop.permute.xlu0 %843
  %845 = vrot.lane.b32.xlu0 %v749, 127
  %v846 = vpop.permute.xlu0 %845
  %847 = vrot.lane.b32.xlu0 %v750, 127
  %v848 = vpop.permute.xlu0 %847
  %849 = vrot.lane.b32.xlu0 %v751, 127
  %v850 = vpop.permute.xlu0 %849
  %v851 = vsel %vm238, %v848, %v850
  %v852 = vsel %vm238, %v846, %v848
  %v853 = vsel %vm238, %v844, %v846
  %v854 = vsel %vm238, %v850, %v844
  %v855 = vmul.f32 %v853, %v246
  %v856 = vmul.f32 %v852, %v250
  %v857 = vmul.f32 %v851, %v254
  %v858 = vmul.f32 %v854, %v258
  %v863 = vrot.slane %v839, 4
  %v864 = vrot.slane %v840, 4
  %v865 = vrot.slane %v841, 4
  %v866 = vrot.slane %v842, 4
  %v871 = vsel %vm162, %v835, %v863
  %v872 = vsel %vm162, %v836, %v864
  %v873 = vsel %vm162, %v837, %v865
  %v874 = vsel %vm162, %v838, %v866
  %v875 = vpack.c.bf16 %v855, %v871
  %v876 = vpack.c.bf16 %v856, %v872
  %v877 = vpack.c.bf16 %v857, %v873
  %v878 = vpack.c.bf16 %v858, %v874
  %v880 = vsel %vm277, %v753, 0
  %v883 = vsel %vm281, %v875, 0
  %v886 = vsel %vm281, %v876, 0
  %v889 = vsel %vm281, %v877, 0
  %v892 = vsel %vm281, %v878, 0
  %894 = vmatprep.subr.bf16.mxu0 %v886
  %895 = vmatpush1.bf16.msra.mxu0 %v883
  %896 = vmatprep.subr.bf16.mxu0 0
  %897 = vmatpush1.bf16.msra.mxu0 0
  %898 = vmatprep.subr.bf16.mxu0 0
  %899 = vmatpush1.bf16.msra.mxu0 0
  %900 = vmatprep.subr.bf16.mxu0 0
  %901 = vmatpush1.bf16.msra.mxu0 0
  %902 = vmatprep.subr.bf16.mxu0 0
  %903 = vmatpush1.bf16.msra.mxu0 0
  %904 = vmatprep.subr.bf16.mxu0 0
  %905 = vmatpush1.bf16.msra.mxu0 0
  %906 = vmatprep.subr.bf16.mxu0 0
  %907 = vmatpush1.bf16.msra.mxu0 0
  %908 = vmatprep.subr.bf16.mxu0 0
  %909 = vmatpush1.bf16.msra.mxu0 0
  %910 = vmatprep.subr.bf16.mxu0 0
  %911 = vmatpush1.bf16.msra.mxu0 0
  %912 = vmatprep.subr.bf16.mxu0 0
  %913 = vmatpush1.bf16.msra.mxu0 0
  %914 = vmatprep.subr.bf16.mxu0 0
  %915 = vmatpush1.bf16.msra.mxu0 0
  %916 = vmatprep.subr.bf16.mxu0 0
  %917 = vmatpush1.bf16.msra.mxu0 0
  %918 = vmatprep.subr.bf16.mxu0 0
  %919 = vmatpush1.bf16.msra.mxu0 0
  %920 = vmatprep.subr.bf16.mxu0 0
  %921 = vmatpush1.bf16.msra.mxu0 0
  %922 = vmatprep.subr.bf16.mxu0 0
  %923 = vmatpush1.bf16.msra.mxu0 0
  %924 = vmatprep.subr.bf16.mxu0 0
  %925 = vmatpush1.bf16.msra.mxu0 0
  %926 = vmatprep.mubr.bf16.mxu0 0
  %927 = vmatmul.mubr.bf16.gmra.mrb[0].mxu0 %v880
  %v928 = vpop.f32.mrb[0].mxu0
  %v929 = vadd.f32 0.0, %v928
  %v930 = vpop.f32.mrb[0].mxu0
  %v931 = vadd.f32 0.0, %v930
  %v932 = vpop.f32.mrb[0].mxu0
  %v933 = vpop.f32.mrb[0].mxu0
  %934 = vdwg.mxu0
  %935 = vmatprep.subr.bf16.mxu0 %v892
  %936 = vmatpush1.bf16.msra.mxu0 %v889
  %937 = vmatprep.subr.bf16.mxu0 0
  %938 = vmatpush1.bf16.msra.mxu0 0
  %939 = vmatprep.subr.bf16.mxu0 0
  %940 = vmatpush1.bf16.msra.mxu0 0
  %941 = vmatprep.subr.bf16.mxu0 0
  %942 = vmatpush1.bf16.msra.mxu0 0
  %943 = vmatprep.subr.bf16.mxu0 0
  %944 = vmatpush1.bf16.msra.mxu0 0
  %945 = vmatprep.subr.bf16.mxu0 0
  %946 = vmatpush1.bf16.msra.mxu0 0
  %947 = vmatprep.subr.bf16.mxu0 0
  %948 = vmatpush1.bf16.msra.mxu0 0
  %949 = vmatprep.subr.bf16.mxu0 0
  %950 = vmatpush1.bf16.msra.mxu0 0
  %951 = vmatprep.subr.bf16.mxu0 0
  %952 = vmatpush1.bf16.msra.mxu0 0
  %953 = vmatprep.subr.bf16.mxu0 0
  %954 = vmatpush1.bf16.msra.mxu0 0
  %955 = vmatprep.subr.bf16.mxu0 0
  %956 = vmatpush1.bf16.msra.mxu0 0
  %957 = vmatprep.subr.bf16.mxu0 0
  %958 = vmatpush1.bf16.msra.mxu0 0
  %959 = vmatprep.subr.bf16.mxu0 0
  %960 = vmatpush1.bf16.msra.mxu0 0
  %961 = vmatprep.subr.bf16.mxu0 0
  %962 = vmatpush1.bf16.msra.mxu0 0
  %963 = vmatprep.subr.bf16.mxu0 0
  %964 = vmatpush1.bf16.msra.mxu0 0
  %965 = vmatprep.subr.bf16.mxu0 0
  %966 = vmatpush1.bf16.msra.mxu0 0
  %967 = vmatprep.mubr.bf16.mxu0 0
  %968 = vmatmul.mubr.bf16.gmra.mrb[0].mxu0 %v880
  %v969 = vpop.f32.mrb[0].mxu0
  %v970 = vadd.f32 0.0, %v969
  %v971 = vpop.f32.mrb[0].mxu0
  %v972 = vadd.f32 0.0, %v971
  %v973 = vpop.f32.mrb[0].mxu0
  %v974 = vpop.f32.mrb[0].mxu0
  %975 = vdwg.mxu0
  %v977 = vsel %vm277, %v752, 0
  %v980 = vsel %vm281, %v819, 0
  %v983 = vsel %vm281, %v820, 0
  %v986 = vsel %vm281, %v821, 0
  %v989 = vsel %vm281, %v822, 0
  %991 = vmatprep.subr.bf16.mxu0 %v983
  %992 = vmatpush1.bf16.msra.mxu0 %v980
  %993 = vmatprep.subr.bf16.mxu0 0
  %994 = vmatpush1.bf16.msra.mxu0 0
  %995 = vmatprep.subr.bf16.mxu0 0
  %996 = vmatpush1.bf16.msra.mxu0 0
  %997 = vmatprep.subr.bf16.mxu0 0
  %998 = vmatpush1.bf16.msra.mxu0 0
  %999 = vmatprep.subr.bf16.mxu0 0
  %1000 = vmatpush1.bf16.msra.mxu0 0
  %1001 = vmatprep.subr.bf16.mxu0 0
  %1002 = vmatpush1.bf16.msra.mxu0 0
  %1003 = vmatprep.subr.bf16.mxu0 0
  %1004 = vmatpush1.bf16.msra.mxu0 0
  %1005 = vmatprep.subr.bf16.mxu0 0
  %1006 = vmatpush1.bf16.msra.mxu0 0
  %1007 = vmatprep.subr.bf16.mxu0 0
  %1008 = vmatpush1.bf16.msra.mxu0 0
  %1009 = vmatprep.subr.bf16.mxu0 0
  %1010 = vmatpush1.bf16.msra.mxu0 0
  %1011 = vmatprep.subr.bf16.mxu0 0
  %1012 = vmatpush1.bf16.msra.mxu0 0
  %1013 = vmatprep.subr.bf16.mxu0 0
  %1014 = vmatpush1.bf16.msra.mxu0 0
  %1015 = vmatprep.subr.bf16.mxu0 0
  %1016 = vmatpush1.bf16.msra.mxu0 0
  %1017 = vmatprep.subr.bf16.mxu0 0
  %1018 = vmatpush1.bf16.msra.mxu0 0
  %1019 = vmatprep.subr.bf16.mxu0 0
  %1020 = vmatpush1.bf16.msra.mxu0 0
  %1021 = vmatprep.subr.bf16.mxu0 0
  %1022 = vmatpush1.bf16.msra.mxu0 0
  %1023 = vmatprep.mubr.bf16.mxu0 0
  %1024 = vmatmul.mubr.bf16.gmra.mrb[0].mxu0 %v977
  %v1025 = vpop.f32.mrb[0].mxu0
  %v1026 = vadd.f32 %v929, %v1025
  %v1027 = vpop.f32.mrb[0].mxu0
  %v1028 = vadd.f32 %v931, %v1027
  %v1029 = vpop.f32.mrb[0].mxu0
  %v1030 = vpop.f32.mrb[0].mxu0
  %1031 = vdwg.mxu0
  %1032 = vmatprep.subr.bf16.mxu0 %v989
  %1033 = vmatpush1.bf16.msra.mxu0 %v986
  %1034 = vmatprep.subr.bf16.mxu0 0
  %1035 = vmatpush1.bf16.msra.mxu0 0
  %1036 = vmatprep.subr.bf16.mxu0 0
  %1037 = vmatpush1.bf16.msra.mxu0 0
  %1038 = vmatprep.subr.bf16.mxu0 0
  %1039 = vmatpush1.bf16.msra.mxu0 0
  %1040 = vmatprep.subr.bf16.mxu0 0
  %1041 = vmatpush1.bf16.msra.mxu0 0
  %1042 = vmatprep.subr.bf16.mxu0 0
  %1043 = vmatpush1.bf16.msra.mxu0 0
  %1044 = vmatprep.subr.bf16.mxu0 0
  %1045 = vmatpush1.bf16.msra.mxu0 0
  %1046 = vmatprep.subr.bf16.mxu0 0
  %1047 = vmatpush1.bf16.msra.mxu0 0
  %1048 = vmatprep.subr.bf16.mxu0 0
  %1049 = vmatpush1.bf16.msra.mxu0 0
  %1050 = vmatprep.subr.bf16.mxu0 0
  %1051 = vmatpush1.bf16.msra.mxu0 0
  %1052 = vmatprep.subr.bf16.mxu0 0
  %1053 = vmatpush1.bf16.msra.mxu0 0
  %1054 = vmatprep.subr.bf16.mxu0 0
  %1055 = vmatpush1.bf16.msra.mxu0 0
  %1056 = vmatprep.subr.bf16.mxu0 0
  %1057 = vmatpush1.bf16.msra.mxu0 0
  %1058 = vmatprep.subr.bf16.mxu0 0
  %1059 = vmatpush1.bf16.msra.mxu0 0
  %1060 = vmatprep.subr.bf16.mxu0 0
  %1061 = vmatpush1.bf16.msra.mxu0 0
  %1062 = vmatprep.subr.bf16.mxu0 0
  %1063 = vmatpush1.bf16.msra.mxu0 0
  %1064 = vmatprep.mubr.bf16.mxu0 0
  %1065 = vmatmul.mubr.bf16.gmra.mrb[0].mxu0 %v977
  %v1066 = vpop.f32.mrb[0].mxu0
  %v1067 = vadd.f32 %v970, %v1066
  %v1068 = vpop.f32.mrb[0].mxu0
  %v1069 = vadd.f32 %v972, %v1068
  %v1070 = vpop.f32.mrb[0].mxu0
  %v1071 = vpop.f32.mrb[0].mxu0
  %1072 = vdwg.mxu0
  %1073 = vrot.lane.b32.xlu0 %v748, 113
  %v1074 = vpop.permute.xlu0 %1073
  %1075 = vrot.lane.b32.xlu0 %v749, 113
  %v1076 = vpop.permute.xlu0 %1075
  %1077 = vrot.lane.b32.xlu0 %v750, 113
  %v1078 = vpop.permute.xlu0 %1077
  %1079 = vrot.lane.b32.xlu0 %v751, 113
  %v1080 = vpop.permute.xlu0 %1079
  %v1081 = vsel %vm481, %v1078, %v1080
  %v1082 = vsel %vm481, %v1076, %v1078
  %v1083 = vsel %vm481, %v1074, %v1076
  %v1084 = vsel %vm481, %v1080, %v1074
  %v1085 = vmul.f32 %v1083, %v489
  %v1086 = vmul.f32 %v1082, %v493
  %v1087 = vmul.f32 %v1081, %v497
  %v1088 = vmul.f32 %v1084, %v501
  %1089 = vrot.lane.b32.xlu0 %v748, 112
  %v1090 = vpop.permute.xlu0 %1089
  %1091 = vrot.lane.b32.xlu0 %v749, 112
  %v1092 = vpop.permute.xlu0 %1091
  %1093 = vrot.lane.b32.xlu0 %v750, 112
  %v1094 = vpop.permute.xlu0 %1093
  %1095 = vrot.lane.b32.xlu0 %v751, 112
  %v1096 = vpop.permute.xlu0 %1095
  %v1097 = vsel %vm514, %v1094, %v1096
  %v1098 = vsel %vm514, %v1092, %v1094
  %v1099 = vsel %vm514, %v1090, %v1092
  %v1100 = vsel %vm514, %v1096, %v1090
  %v1101 = vmul.f32 %v1099, %v522
  %v1102 = vmul.f32 %v1098, %v526
  %v1103 = vmul.f32 %v1097, %v530
  %v1104 = vmul.f32 %v1100, %v534
  %1105 = vrot.lane.b32.xlu0 %v748, 111
  %v1106 = vpop.permute.xlu0 %1105
  %1107 = vrot.lane.b32.xlu0 %v749, 111
  %v1108 = vpop.permute.xlu0 %1107
  %1109 = vrot.lane.b32.xlu0 %v750, 111
  %v1110 = vpop.permute.xlu0 %1109
  %1111 = vrot.lane.b32.xlu0 %v751, 111
  %v1112 = vpop.permute.xlu0 %1111
  %v1113 = vsel %vm547, %v1110, %v1112
  %v1114 = vsel %vm547, %v1108, %v1110
  %v1115 = vsel %vm547, %v1106, %v1108
  %v1116 = vsel %vm547, %v1112, %v1106
  %v1117 = vmul.f32 %v1115, %v555
  %v1118 = vmul.f32 %v1114, %v559
  %v1119 = vmul.f32 %v1113, %v563
  %v1120 = vmul.f32 %v1116, %v567
  %v1125 = vrot.slane %v1101, 4
  %v1126 = vrot.slane %v1102, 4
  %v1127 = vrot.slane %v1103, 4
  %v1128 = vrot.slane %v1104, 4
  %v1133 = vsel %vm162, %v1085, %v1125
  %v1134 = vsel %vm162, %v1086, %v1126
  %v1135 = vsel %vm162, %v1087, %v1127
  %v1136 = vsel %vm162, %v1088, %v1128
  %v1137 = vpack.c.bf16 %v1117, %v1133
  %v1138 = vpack.c.bf16 %v1118, %v1134
  %v1139 = vpack.c.bf16 %v1119, %v1135
  %v1140 = vpack.c.bf16 %v1120, %v1136
  %v1142 = vsel %vm277, %v754, 0
  %v1145 = vsel %vm281, %v1137, 0
  %v1148 = vsel %vm281, %v1138, 0
  %v1151 = vsel %vm281, %v1139, 0
  %v1154 = vsel %vm281, %v1140, 0
  %1156 = vmatprep.subr.bf16.mxu0 %v1148
  %1157 = vmatpush1.bf16.msra.mxu0 %v1145
  %1158 = vmatprep.subr.bf16.mxu0 0
  %1159 = vmatpush1.bf16.msra.mxu0 0
  %1160 = vmatprep.subr.bf16.mxu0 0
  %1161 = vmatpush1.bf16.msra.mxu0 0
  %1162 = vmatprep.subr.bf16.mxu0 0
  %1163 = vmatpush1.bf16.msra.mxu0 0
  %1164 = vmatprep.subr.bf16.mxu0 0
  %1165 = vmatpush1.bf16.msra.mxu0 0
  %1166 = vmatprep.subr.bf16.mxu0 0
  %1167 = vmatpush1.bf16.msra.mxu0 0
  %1168 = vmatprep.subr.bf16.mxu0 0
  %1169 = vmatpush1.bf16.msra.mxu0 0
  %1170 = vmatprep.subr.bf16.mxu0 0
  %1171 = vmatpush1.bf16.msra.mxu0 0
  %1172 = vmatprep.subr.bf16.mxu0 0
  %1173 = vmatpush1.bf16.msra.mxu0 0
  %1174 = vmatprep.subr.bf16.mxu0 0
  %1175 = vmatpush1.bf16.msra.mxu0 0
  %1176 = vmatprep.subr.bf16.mxu0 0
  %1177 = vmatpush1.bf16.msra.mxu0 0
  %1178 = vmatprep.subr.bf16.mxu0 0
  %1179 = vmatpush1.bf16.msra.mxu0 0
  %1180 = vmatprep.subr.bf16.mxu0 0
  %1181 = vmatpush1.bf16.msra.mxu0 0
  %1182 = vmatprep.subr.bf16.mxu0 0
  %1183 = vmatpush1.bf16.msra.mxu0 0
  %1184 = vmatprep.subr.bf16.mxu0 0
  %1185 = vmatpush1.bf16.msra.mxu0 0
  %1186 = vmatprep.subr.bf16.mxu0 0
  %1187 = vmatpush1.bf16.msra.mxu0 0
  %1188 = vmatprep.mubr.bf16.mxu0 0
  %1189 = vmatmul.mubr.bf16.gmra.mrb[0].mxu0 %v1142
  %v1190 = vpop.f32.mrb[0].mxu0
  %v1191 = vadd.f32 0.0, %v1190
  %v1192 = vpop.f32.mrb[0].mxu0
  %v1193 = vadd.f32 0.0, %v1192
  %v1194 = vpop.f32.mrb[0].mxu0
  %v1195 = vpop.f32.mrb[0].mxu0
  %1196 = vdwg.mxu0
  %1197 = vmatprep.subr.bf16.mxu0 %v1154
  %1198 = vmatpush1.bf16.msra.mxu0 %v1151
  %1199 = vmatprep.subr.bf16.mxu0 0
  %1200 = vmatpush1.bf16.msra.mxu0 0
  %1201 = vmatprep.subr.bf16.mxu0 0
  %1202 = vmatpush1.bf16.msra.mxu0 0
  %1203 = vmatprep.subr.bf16.mxu0 0
  %1204 = vmatpush1.bf16.msra.mxu0 0
  %1205 = vmatprep.subr.bf16.mxu0 0
  %1206 = vmatpush1.bf16.msra.mxu0 0
  %1207 = vmatprep.subr.bf16.mxu0 0
  %1208 = vmatpush1.bf16.msra.mxu0 0
  %1209 = vmatprep.subr.bf16.mxu0 0
  %1210 = vmatpush1.bf16.msra.mxu0 0
  %1211 = vmatprep.subr.bf16.mxu0 0
  %1212 = vmatpush1.bf16.msra.mxu0 0
  %1213 = vmatprep.subr.bf16.mxu0 0
  %1214 = vmatpush1.bf16.msra.mxu0 0
  %1215 = vmatprep.subr.bf16.mxu0 0
  %1216 = vmatpush1.bf16.msra.mxu0 0
  %1217 = vmatprep.subr.bf16.mxu0 0
  %1218 = vmatpush1.bf16.msra.mxu0 0
  %1219 = vmatprep.subr.bf16.mxu0 0
  %1220 = vmatpush1.bf16.msra.mxu0 0
  %1221 = vmatprep.subr.bf16.mxu0 0
  %1222 = vmatpush1.bf16.msra.mxu0 0
  %1223 = vmatprep.subr.bf16.mxu0 0
  %1224 = vmatpush1.bf16.msra.mxu0 0
  %1225 = vmatprep.subr.bf16.mxu0 0
  %1226 = vmatpush1.bf16.msra.mxu0 0
  %1227 = vmatprep.subr.bf16.mxu0 0
  %1228 = vmatpush1.bf16.msra.mxu0 0
  %1229 = vmatprep.mubr.bf16.mxu0 0
  %1230 = vmatmul.mubr.bf16.gmra.mrb[0].mxu0 %v1142
  %v1231 = vpop.f32.mrb[0].mxu0
  %v1232 = vadd.f32 0.0, %v1231
  %v1233 = vpop.f32.mrb[0].mxu0
  %v1234 = vadd.f32 0.0, %v1233
  %v1235 = vpop.f32.mrb[0].mxu0
  %v1236 = vpop.f32.mrb[0].mxu0
  %1237 = vdwg.mxu0
  %v1238 = vadd.f32 %v1026, %v1191
  %v1239 = vadd.f32 %v1028, %v1193
  %v1240 = vadd.f32 %v1067, %v1232
  %v1241 = vadd.f32 %v1069, %v1234
  %v1242 = vsel %vm162, %v1238, 0.0
  %v1243 = vsel %vm162, %v1239, 0.0
  %v1244 = vadd.f32 %v1242, %v1243
  %v1245 = vsel %vm162, %v1240, 0.0
  %v1246 = vadd.f32 %v1244, %v1245
  %v1247 = vsel %vm162, %v1241, 0.0
  %v1248 = vadd.f32 %v1246, %v1247
  %1249 = vadd.xlane.f32.xlu0 %v1248
  %v1250 = vpop.xlane.xlu0 %1249
  %v1251 = vmul.f32 %v1250, %v702
  %v1252 = vsub.f32 %v1238, %v1251
  %v1253 = vsub.f32 %v1239, %v1251
  %v1254 = vsub.f32 %v1240, %v1251
  %v1255 = vsub.f32 %v1241, %v1251
  %v1256 = vmul.f32 %v1252, %v1252
  %v1257 = vmul.f32 %v1253, %v1253
  %v1258 = vmul.f32 %v1254, %v1254
  %v1259 = vmul.f32 %v1255, %v1255
  %v1260 = vsel %vm162, %v1256, 0.0
  %v1261 = vsel %vm162, %v1257, 0.0
  %v1262 = vadd.f32 %v1260, %v1261
  %v1263 = vsel %vm162, %v1258, 0.0
  %v1264 = vadd.f32 %v1262, %v1263
  %v1265 = vsel %vm162, %v1259, 0.0
  %v1266 = vadd.f32 %v1264, %v1265
  %1267 = vadd.xlane.f32.xlu0 %v1266
  %v1268 = vpop.xlane.xlu0 %1267
  %v1269 = vmul.f32 %v1268, %v702
  %v1270 = vadd.f32 %v1269, 1e-05
  %v1271 = vrsqrt.pop %v1270
  %v1272 = vmul.f32 %v1252, %v1271
  %v1273 = vmul.f32 %v1253, %v1271
  %v1274 = vmul.f32 %v1254, %v1271
  %v1275 = vmul.f32 %v1255, %v1271
  %v1276 = vld [vmem:[%s6] sm:$0xf]
  %1278 = vset.pattern.permute.xlu0 0
  %1279 = vperm.xlu0 %1278, %v1276
  %v1280 = vpop.permute.xlu0 %1279
  %v1282 = vmul.f32 %v1272, %v1280
  %v1283 = vmul.f32 %v1273, %v1280
  %v1284 = vmul.f32 %v1274, %v1280
  %v1285 = vmul.f32 %v1275, %v1280
  %v1286 = vld [vmem:[%s7] sm:$0xf]
  %1288 = vset.pattern.permute.xlu0 0
  %1289 = vperm.xlu0 %1288, %v1286
  %v1290 = vpop.permute.xlu0 %1289
  %v1292 = vadd.f32 %v1282, %v1290
  %v1293 = vadd.f32 %v1283, %v1290
  %v1294 = vadd.f32 %v1284, %v1290
  %v1295 = vadd.f32 %v1285, %v1290
  %v1296 = vadd.f32 %v1292, %v30
  %v1297 = vadd.f32 %v1293, %v45
  %v1298 = vadd.f32 %v1294, %v31
  %v1299 = vadd.f32 %v1295, %v46
  %v1300 = vmax.f32 %v1296, 0.0
  %v1301 = vmax.f32 %v1297, 0.0
  %v1302 = vmax.f32 %v1298, 0.0
  %v1303 = vmax.f32 %v1299, 0.0
  %v1308 = vcombine.low %v1300, %v1301
  %v1309 = vcombine.low %v1302, %v1303
  %1312 = vst [vmem:[%s8] sm:$0xff] %v1308
  %1313 = vst [vmem:[%s8 + $0x8] sm:$0xff] %v1309
  // Predicated region
  $region34: #{residual_block.1} parent=0 // pred_check
    _
  $region35: #{residual_block.1} parent=0 // pred_check_branch
    %1315 = sbr.rel (0) target = $region37
  $region36: #{residual_block.1} parent=0 // pred_region
    _
  $region37: #{residual_block.1} parent=0 // pred_fallthru
    _
  // Predicated region
  $region38: #{residual_block.1} parent=0 // pred_check
    _
  $region39: #{residual_block.1} parent=0 // pred_check_branch
    %1317 = sbr.rel (0) target = $region41
  $region40: #{residual_block.1} parent=0 // pred_region
    _
  $region41: #{residual_block.1} parent=0 // pred_fallthru
    _

</llo_original>
